<compile_context>
chip_gen: v5e
topology: v5e:2x2
jax: 0.10.0
libtpu: 0.0.40
codegen_flags: <defaults>
</compile_context>

<pallas_src>
import jax
import jax.numpy as jnp
from jax.experimental import pallas as pl
from jax.experimental.pallas import tpu as pltpu

NUM_HIDDEN_LAYERS = 8  # `layers=8` in the PyTorch module


def res_linear_kernel(x_ref, w1_ref, b1_ref, ws_ref, bs_ref, w2_ref, b2_ref,
                      o_ref):
    """Full ResLinearBlock forward for one batch tile, entirely in VMEM.

    Weights and x are bf16, biases f32; all dots accumulate in f32 (MXU), all
    element-wise work (bias add, ReLU, residual) runs in f32 on the VPU.
    """
    x = x_ref[...]  # already bf16 (cast in the wrapper)

    # layer1 -> ReLU -> Dropout(identity)
    out = jnp.dot(x, w1_ref[...],
                  preferred_element_type=jnp.float32) + b1_ref[...]
    out = jnp.maximum(out, 0.0)

    last = out
    # residual hidden layers (statically unrolled — weights indexed statically)
    for i in range(ws_ref.shape[0]):
        if i != 0 and i % 2 == 0:
            out = out + last
        out = jnp.dot(out.astype(jnp.bfloat16), ws_ref[i],
                      preferred_element_type=jnp.float32) + bs_ref[i]
        # every i is in relu_layers_index / dropout_layers_index (== [0..7])
        out = jnp.maximum(out, 0.0)
        if i != 0 and i % 2 == 0:
            last = out

    # layer2 -> Dropout(identity)
    out = jnp.dot(out.astype(jnp.bfloat16), w2_ref[...],
                  preferred_element_type=jnp.float32) + b2_ref[...]
    o_ref[...] = out.astype(o_ref.dtype)


def _round_up(n, m):
    return ((n + m - 1) // m) * m


def _cdiv(a, b):
    return -(-a // b)


def _physical_vmem_bytes():
    """Per-core physical VMEM; conservative (v7x = 64 MiB) fallback."""
    try:
        info = pltpu.get_tpu_info()
        vmem = getattr(info, "vmem_capacity_bytes", None)
        if vmem:
            return int(vmem)
    except Exception:
        pass
    return 64 * 1024 * 1024


def res_linear_block(x, w1, b1, ws, bs, w2, b2, *, tile_b=512,
                     weight_dtype=jnp.bfloat16):
    """Pad to lane/sublane-aligned shapes, tile the batch, call the kernel.

    NOTE: weights are down-cast to `weight_dtype` (bf16 by default); error vs
    an fp32 PyTorch module compounds over the 10 chained matmuls at large
    hidden sizes — pass weight_dtype=jnp.float32 if bit-closer parity matters.
    """
    B, D_in = x.shape
    H = w1.shape[1]
    D_out = w2.shape[1]
    L = ws.shape[0]

    # Lane-align feature dims (128) so matmuls are MXU-shaped and the output
    # store is lane-dense; batch tile is a sublane multiple (>= 8).
    D_in_p = _round_up(D_in, 128)
    H_p = _round_up(H, 128)
    D_out_p = _round_up(D_out, 128)

    wbytes = jnp.dtype(weight_dtype).itemsize
    resident_w = wbytes * (D_in_p * H_p + L * H_p * H_p + H_p * D_out_p)
    resident_b = 4 * (H_p + L * H_p + D_out_p)

    def per_tile_bytes(tb):
        act_in = 2 * tb * D_in_p * 2       # double-buffered bf16 x tiles
        act_out = 2 * tb * D_out_p * 4     # double-buffered f32 out tiles
        interm = 4 * tb * H_p * 4          # f32 out/last + matmul temporaries
        return act_in + act_out + interm

    phys = _physical_vmem_bytes()
    cap = int(phys * 0.85)                 # leave room for Mosaic scratch

    # Batch-tile selection: ceil-split so the last tile is not mostly padding
    # (e.g. B=300 no longer pads to 512), then shrink while the footprint
    # (conservatively counting weights twice) would blow the VMEM budget.
    tile_b = max(8, min(int(tile_b), _round_up(B, 8)))
    while True:
        n_tiles = _cdiv(B, tile_b)
        tile_b = _round_up(_cdiv(B, n_tiles), 8)
        if (2 * resident_w + resident_b + per_tile_bytes(tile_b) <= cap
                or tile_b <= 64):
            break
        tile_b = max(64, _round_up(tile_b // 2, 8))
    B_p = n_tiles * tile_b

    def pad2(a, rows, cols):
        return jnp.pad(a, ((0, rows - a.shape[0]), (0, cols - a.shape[1])))

    # Zero padding is exact: padded weight rows/cols and biases are zero, so
    # padded hidden columns stay zero through ReLU/residual and padded output
    # columns / batch rows are sliced off below.
    x_p = pad2(x, B_p, D_in_p).astype(jnp.bfloat16)
    w1_p = pad2(w1, D_in_p, H_p).astype(weight_dtype)
    b1_p = pad2(b1, 1, H_p).astype(jnp.float32)
    ws_p = jnp.pad(ws, ((0, 0), (0, H_p - H), (0, H_p - H))).astype(weight_dtype)
    bs_p = jnp.pad(bs, ((0, 0), (0, 0), (0, H_p - H))).astype(jnp.float32)
    w2_p = pad2(w2, H_p, D_out_p).astype(weight_dtype)
    b2_p = pad2(b2, 1, D_out_p).astype(jnp.float32)

    grid = (B_p // tile_b,)
    # Megacore batch-sharding only pays off with >= 2 batch tiles of real work.
    dim_sem = ("parallel",) if grid[0] >= 2 else ("arbitrary",)

    def build_call(single_buffer_weights):
        weight_kw = ({"pipeline_mode": pl.Buffered(1)}
                     if single_buffer_weights else {})
        n_copies = 1 if single_buffer_weights else 2
        needed = n_copies * resident_w + resident_b + per_tile_bytes(tile_b)
        vmem_limit = min(max(int(needed * 1.25) + (8 << 20), 32 << 20), cap)
        in_specs = [
            # streaming activation tile
            pl.BlockSpec((tile_b, D_in_p), lambda i: (i, 0)),
            # grid-invariant (constant block index) VMEM-resident weights/biases
            pl.BlockSpec((D_in_p, H_p), lambda i: (0, 0), **weight_kw),
            pl.BlockSpec((1, H_p), lambda i: (0, 0), **weight_kw),
            pl.BlockSpec((L, H_p, H_p), lambda i: (0, 0, 0), **weight_kw),
            pl.BlockSpec((L, 1, H_p), lambda i: (0, 0, 0), **weight_kw),
            pl.BlockSpec((H_p, D_out_p), lambda i: (0, 0), **weight_kw),
            pl.BlockSpec((1, D_out_p), lambda i: (0, 0), **weight_kw),
        ]
        return pl.pallas_call(
            res_linear_kernel,
            out_shape=jax.ShapeDtypeStruct((B_p, D_out_p), jnp.float32),
            grid=grid,
            in_specs=in_specs,
            out_specs=pl.BlockSpec((tile_b, D_out_p), lambda i: (i, 0)),
            compiler_params=pltpu.CompilerParams(
                dimension_semantics=dim_sem,
                vmem_limit_bytes=vmem_limit,
            ),
        )

    args = (x_p, w1_p, b1_p, ws_p, bs_p, w2_p, b2_p)
    try:
        out_p = jax.block_until_ready(build_call(True)(*args))
    except Exception:
        # Fallback for builds that reject single-buffered (Buffered(1)) specs.
        out_p = build_call(False)(*args)

    return out_p[:B, :D_out]


def init_params(key, input_dim, hidden_dim, output_dim, layers=NUM_HIDDEN_LAYERS):
    """Deterministic PyTorch-style init: U(-1/sqrt(fan_in), 1/sqrt(fan_in))."""
    keys = jax.random.split(key, 2 * (layers + 2))
    ki = iter(keys)

    def linear(in_f, out_f):
        bound = 1.0 / jnp.sqrt(in_f)
        w = jax.random.uniform(next(ki), (in_f, out_f), jnp.float32, -bound, bound)
        b = jax.random.uniform(next(ki), (1, out_f), jnp.float32, -bound, bound)
        return w, b

    w1, b1 = linear(input_dim, hidden_dim)
    ws_list, bs_list = [], []
    for _ in range(layers):
        w, b = linear(hidden_dim, hidden_dim)
        ws_list.append(w)
        bs_list.append(b)
    ws = jnp.stack(ws_list, axis=0)                 # (L, H, H)
    bs = jnp.stack(bs_list, axis=0)                 # (L, 1, H)
    w2, b2 = linear(hidden_dim, output_dim)
    return w1, b1, ws, bs, w2, b2


def reference_forward(x, w1, b1, ws, bs, w2, b2):
    """Pure-JAX reference mirroring the kernel's numerics
    (bf16 weights/activations into each dot, f32 accumulate, eval-mode dropout)."""
    def lin(a, w, b):
        return jnp.dot(a.astype(jnp.bfloat16), w.astype(jnp.bfloat16),
                       preferred_element_type=jnp.float32) + b

    out = jnp.maximum(lin(x, w1, b1), 0.0)
    last = out
    for i in range(ws.shape[0]):
        if i != 0 and i % 2 == 0:
            out = out + last
        out = jnp.maximum(lin(out, ws[i], bs[i]), 0.0)
        if i != 0 and i % 2 == 0:
            last = out
    return lin(out, w2, b2)


if __name__ == "__main__":
    batch = 8
    input_dim = 32
    hidden_dim = 64
    output_dim = 16

    key = jax.random.PRNGKey(0)
    key_x, key_p = jax.random.split(key)
    x = jax.random.normal(key_x, (batch, input_dim), jnp.float32)
    params = init_params(key_p, input_dim, hidden_dim, output_dim)

    out = res_linear_block(x, *params)
    out = jax.block_until_ready(out)

    ref = reference_forward(x, *params)
    assert out.shape == (batch, output_dim)
    assert jnp.allclose(out, ref, atol=2e-3, rtol=2e-3), "mismatch vs reference"

    print("KERNEL_OK")
</pallas_src>

<mosaic_0001>
module attributes {stable_mosaic.version = 11 : i64} {
  func.func @res_linear_kernel(%arg0: i32, %arg1: memref<8x128xbf16, #tpu.memory_space<vmem>>, %arg2: memref<128x128xbf16, #tpu.memory_space<vmem>>, %arg3: memref<1x128xf32, #tpu.memory_space<vmem>>, %arg4: memref<8x128x128xbf16, #tpu.memory_space<vmem>>, %arg5: memref<8x1x128xf32, #tpu.memory_space<vmem>>, %arg6: memref<128x128xbf16, #tpu.memory_space<vmem>>, %arg7: memref<1x128xf32, #tpu.memory_space<vmem>>, %arg8: memref<8x128xf32, #tpu.memory_space<vmem>>) attributes {dimension_semantics = [#tpu.dimension_semantics<arbitrary>], iteration_bounds = array<i64: 1>, scalar_prefetch = 0 : i64, scratch_operands = 0 : i64, tpu.core_type = #tpu.core_type<tc>, window_params = [{transform_indices = @transform_0, window_bounds = array<i64: 8, 128>}, {pipeline_mode = #tpu.pipeline_mode<synchronous>, transform_indices = @transform_1, window_bounds = array<i64: 128, 128>}, {pipeline_mode = #tpu.pipeline_mode<synchronous>, transform_indices = @transform_2, window_bounds = array<i64: 1, 128>}, {pipeline_mode = #tpu.pipeline_mode<synchronous>, transform_indices = @transform_3, window_bounds = array<i64: 8, 128, 128>}, {pipeline_mode = #tpu.pipeline_mode<synchronous>, transform_indices = @transform_4, window_bounds = array<i64: 8, 1, 128>}, {pipeline_mode = #tpu.pipeline_mode<synchronous>, transform_indices = @transform_5, window_bounds = array<i64: 128, 128>}, {pipeline_mode = #tpu.pipeline_mode<synchronous>, transform_indices = @transform_6, window_bounds = array<i64: 1, 128>}, {transform_indices = @transform_7, window_bounds = array<i64: 8, 128>}]} {
    %c0 = arith.constant 0 : index
    %c0_0 = arith.constant 0 : index
    %0 = vector.load %arg1[%c0, %c0_0] : memref<8x128xbf16, #tpu.memory_space<vmem>>, vector<8x128xbf16>
    %c0_1 = arith.constant 0 : index
    %c0_2 = arith.constant 0 : index
    %1 = vector.load %arg2[%c0_1, %c0_2] : memref<128x128xbf16, #tpu.memory_space<vmem>>, vector<128x128xbf16>
    %cst = arith.constant dense<0.000000e+00> : vector<8x128xf32>
    %2 = tpu.matmul %0, %1, %cst {dimension_numbers = #tpu.dot_dimension_numbers<[1], [0], [0], [1], [0, 0, 1, 1], [], []>} : vector<8x128xbf16>, vector<128x128xbf16>, vector<8x128xf32> -> vector<8x128xf32>
    %c0_3 = arith.constant 0 : index
    %c0_4 = arith.constant 0 : index
    %3 = vector.load %arg3[%c0_3, %c0_4] : memref<1x128xf32, #tpu.memory_space<vmem>>, vector<1x128xf32>
    %4 = vector.broadcast %3 : vector<1x128xf32> to vector<8x128xf32>
    %5 = arith.addf %2, %4 : vector<8x128xf32>
    %cst_5 = arith.constant 0.000000e+00 : f32
    %6 = vector.broadcast %cst_5 : f32 to vector<8x128xf32>
    %7 = arith.maximumf %5, %6 : vector<8x128xf32>
    %8 = arith.truncf %7 : vector<8x128xf32> to vector<8x128xbf16>
    %c0_6 = arith.constant 0 : index
    %c0_7 = arith.constant 0 : index
    %c0_8 = arith.constant 0 : index
    %9 = vector.load %arg4[%c0_6, %c0_7, %c0_8] : memref<8x128x128xbf16, #tpu.memory_space<vmem>>, vector<1x128x128xbf16>
    %10 = vector.shape_cast %9 : vector<1x128x128xbf16> to vector<128x128xbf16>
    %cst_9 = arith.constant dense<0.000000e+00> : vector<8x128xf32>
    %11 = tpu.matmul %8, %10, %cst_9 {dimension_numbers = #tpu.dot_dimension_numbers<[1], [0], [0], [1], [0, 0, 1, 1], [], []>} : vector<8x128xbf16>, vector<128x128xbf16>, vector<8x128xf32> -> vector<8x128xf32>
    %c0_10 = arith.constant 0 : index
    %c0_11 = arith.constant 0 : index
    %c0_12 = arith.constant 0 : index
    %12 = vector.load %arg5[%c0_10, %c0_11, %c0_12] : memref<8x1x128xf32, #tpu.memory_space<vmem>>, vector<1x1x128xf32>
    %13 = vector.shape_cast %12 : vector<1x1x128xf32> to vector<1x128xf32>
    %14 = vector.broadcast %13 : vector<1x128xf32> to vector<8x128xf32>
    %15 = arith.addf %11, %14 : vector<8x128xf32>
    %cst_13 = arith.constant 0.000000e+00 : f32
    %16 = vector.broadcast %cst_13 : f32 to vector<8x128xf32>
    %17 = arith.maximumf %15, %16 : vector<8x128xf32>
    %18 = arith.truncf %17 : vector<8x128xf32> to vector<8x128xbf16>
    %c1 = arith.constant 1 : index
    %c0_14 = arith.constant 0 : index
    %c0_15 = arith.constant 0 : index
    %19 = vector.load %arg4[%c1, %c0_14, %c0_15] : memref<8x128x128xbf16, #tpu.memory_space<vmem>>, vector<1x128x128xbf16>
    %20 = vector.shape_cast %19 : vector<1x128x128xbf16> to vector<128x128xbf16>
    %cst_16 = arith.constant dense<0.000000e+00> : vector<8x128xf32>
    %21 = tpu.matmul %18, %20, %cst_16 {dimension_numbers = #tpu.dot_dimension_numbers<[1], [0], [0], [1], [0, 0, 1, 1], [], []>} : vector<8x128xbf16>, vector<128x128xbf16>, vector<8x128xf32> -> vector<8x128xf32>
    %c1_17 = arith.constant 1 : index
    %c0_18 = arith.constant 0 : index
    %c0_19 = arith.constant 0 : index
    %22 = vector.load %arg5[%c1_17, %c0_18, %c0_19] : memref<8x1x128xf32, #tpu.memory_space<vmem>>, vector<1x1x128xf32>
    %23 = vector.shape_cast %22 : vector<1x1x128xf32> to vector<1x128xf32>
    %24 = vector.broadcast %23 : vector<1x128xf32> to vector<8x128xf32>
    %25 = arith.addf %21, %24 : vector<8x128xf32>
    %cst_20 = arith.constant 0.000000e+00 : f32
    %26 = vector.broadcast %cst_20 : f32 to vector<8x128xf32>
    %27 = arith.maximumf %25, %26 : vector<8x128xf32>
    %28 = arith.addf %27, %7 : vector<8x128xf32>
    %29 = arith.truncf %28 : vector<8x128xf32> to vector<8x128xbf16>
    %c2 = arith.constant 2 : index
    %c0_21 = arith.constant 0 : index
    %c0_22 = arith.constant 0 : index
    %30 = vector.load %arg4[%c2, %c0_21, %c0_22] : memref<8x128x128xbf16, #tpu.memory_space<vmem>>, vector<1x128x128xbf16>
    %31 = vector.shape_cast %30 : vector<1x128x128xbf16> to vector<128x128xbf16>
    %cst_23 = arith.constant dense<0.000000e+00> : vector<8x128xf32>
    %32 = tpu.matmul %29, %31, %cst_23 {dimension_numbers = #tpu.dot_dimension_numbers<[1], [0], [0], [1], [0, 0, 1, 1], [], []>} : vector<8x128xbf16>, vector<128x128xbf16>, vector<8x128xf32> -> vector<8x128xf32>
    %c2_24 = arith.constant 2 : index
    %c0_25 = arith.constant 0 : index
    %c0_26 = arith.constant 0 : index
    %33 = vector.load %arg5[%c2_24, %c0_25, %c0_26] : memref<8x1x128xf32, #tpu.memory_space<vmem>>, vector<1x1x128xf32>
    %34 = vector.shape_cast %33 : vector<1x1x128xf32> to vector<1x128xf32>
    %35 = vector.broadcast %34 : vector<1x128xf32> to vector<8x128xf32>
    %36 = arith.addf %32, %35 : vector<8x128xf32>
    %cst_27 = arith.constant 0.000000e+00 : f32
    %37 = vector.broadcast %cst_27 : f32 to vector<8x128xf32>
    %38 = arith.maximumf %36, %37 : vector<8x128xf32>
    %39 = arith.truncf %38 : vector<8x128xf32> to vector<8x128xbf16>
    %c3 = arith.constant 3 : index
    %c0_28 = arith.constant 0 : index
    %c0_29 = arith.constant 0 : index
    %40 = vector.load %arg4[%c3, %c0_28, %c0_29] : memref<8x128x128xbf16, #tpu.memory_space<vmem>>, vector<1x128x128xbf16>
    %41 = vector.shape_cast %40 : vector<1x128x128xbf16> to vector<128x128xbf16>
    %cst_30 = arith.constant dense<0.000000e+00> : vector<8x128xf32>
    %42 = tpu.matmul %39, %41, %cst_30 {dimension_numbers = #tpu.dot_dimension_numbers<[1], [0], [0], [1], [0, 0, 1, 1], [], []>} : vector<8x128xbf16>, vector<128x128xbf16>, vector<8x128xf32> -> vector<8x128xf32>
    %c3_31 = arith.constant 3 : index
    %c0_32 = arith.constant 0 : index
    %c0_33 = arith.constant 0 : index
    %43 = vector.load %arg5[%c3_31, %c0_32, %c0_33] : memref<8x1x128xf32, #tpu.memory_space<vmem>>, vector<1x1x128xf32>
    %44 = vector.shape_cast %43 : vector<1x1x128xf32> to vector<1x128xf32>
    %45 = vector.broadcast %44 : vector<1x128xf32> to vector<8x128xf32>
    %46 = arith.addf %42, %45 : vector<8x128xf32>
    %cst_34 = arith.constant 0.000000e+00 : f32
    %47 = vector.broadcast %cst_34 : f32 to vector<8x128xf32>
    %48 = arith.maximumf %46, %47 : vector<8x128xf32>
    %49 = arith.addf %48, %38 : vector<8x128xf32>
    %50 = arith.truncf %49 : vector<8x128xf32> to vector<8x128xbf16>
    %c4 = arith.constant 4 : index
    %c0_35 = arith.constant 0 : index
    %c0_36 = arith.constant 0 : index
    %51 = vector.load %arg4[%c4, %c0_35, %c0_36] : memref<8x128x128xbf16, #tpu.memory_space<vmem>>, vector<1x128x128xbf16>
    %52 = vector.shape_cast %51 : vector<1x128x128xbf16> to vector<128x128xbf16>
    %cst_37 = arith.constant dense<0.000000e+00> : vector<8x128xf32>
    %53 = tpu.matmul %50, %52, %cst_37 {dimension_numbers = #tpu.dot_dimension_numbers<[1], [0], [0], [1], [0, 0, 1, 1], [], []>} : vector<8x128xbf16>, vector<128x128xbf16>, vector<8x128xf32> -> vector<8x128xf32>
    %c4_38 = arith.constant 4 : index
    %c0_39 = arith.constant 0 : index
    %c0_40 = arith.constant 0 : index
    %54 = vector.load %arg5[%c4_38, %c0_39, %c0_40] : memref<8x1x128xf32, #tpu.memory_space<vmem>>, vector<1x1x128xf32>
    %55 = vector.shape_cast %54 : vector<1x1x128xf32> to vector<1x128xf32>
    %56 = vector.broadcast %55 : vector<1x128xf32> to vector<8x128xf32>
    %57 = arith.addf %53, %56 : vector<8x128xf32>
    %cst_41 = arith.constant 0.000000e+00 : f32
    %58 = vector.broadcast %cst_41 : f32 to vector<8x128xf32>
    %59 = arith.maximumf %57, %58 : vector<8x128xf32>
    %60 = arith.truncf %59 : vector<8x128xf32> to vector<8x128xbf16>
    %c5 = arith.constant 5 : index
    %c0_42 = arith.constant 0 : index
    %c0_43 = arith.constant 0 : index
    %61 = vector.load %arg4[%c5, %c0_42, %c0_43] : memref<8x128x128xbf16, #tpu.memory_space<vmem>>, vector<1x128x128xbf16>
    %62 = vector.shape_cast %61 : vector<1x128x128xbf16> to vector<128x128xbf16>
    %cst_44 = arith.constant dense<0.000000e+00> : vector<8x128xf32>
    %63 = tpu.matmul %60, %62, %cst_44 {dimension_numbers = #tpu.dot_dimension_numbers<[1], [0], [0], [1], [0, 0, 1, 1], [], []>} : vector<8x128xbf16>, vector<128x128xbf16>, vector<8x128xf32> -> vector<8x128xf32>
    %c5_45 = arith.constant 5 : index
    %c0_46 = arith.constant 0 : index
    %c0_47 = arith.constant 0 : index
    %64 = vector.load %arg5[%c5_45, %c0_46, %c0_47] : memref<8x1x128xf32, #tpu.memory_space<vmem>>, vector<1x1x128xf32>
    %65 = vector.shape_cast %64 : vector<1x1x128xf32> to vector<1x128xf32>
    %66 = vector.broadcast %65 : vector<1x128xf32> to vector<8x128xf32>
    %67 = arith.addf %63, %66 : vector<8x128xf32>
    %cst_48 = arith.constant 0.000000e+00 : f32
    %68 = vector.broadcast %cst_48 : f32 to vector<8x128xf32>
    %69 = arith.maximumf %67, %68 : vector<8x128xf32>
    %70 = arith.addf %69, %59 : vector<8x128xf32>
    %71 = arith.truncf %70 : vector<8x128xf32> to vector<8x128xbf16>
    %c6 = arith.constant 6 : index
    %c0_49 = arith.constant 0 : index
    %c0_50 = arith.constant 0 : index
    %72 = vector.load %arg4[%c6, %c0_49, %c0_50] : memref<8x128x128xbf16, #tpu.memory_space<vmem>>, vector<1x128x128xbf16>
    %73 = vector.shape_cast %72 : vector<1x128x128xbf16> to vector<128x128xbf16>
    %cst_51 = arith.constant dense<0.000000e+00> : vector<8x128xf32>
    %74 = tpu.matmul %71, %73, %cst_51 {dimension_numbers = #tpu.dot_dimension_numbers<[1], [0], [0], [1], [0, 0, 1, 1], [], []>} : vector<8x128xbf16>, vector<128x128xbf16>, vector<8x128xf32> -> vector<8x128xf32>
    %c6_52 = arith.constant 6 : index
    %c0_53 = arith.constant 0 : index
    %c0_54 = arith.constant 0 : index
    %75 = vector.load %arg5[%c6_52, %c0_53, %c0_54] : memref<8x1x128xf32, #tpu.memory_space<vmem>>, vector<1x1x128xf32>
    %76 = vector.shape_cast %75 : vector<1x1x128xf32> to vector<1x128xf32>
    %77 = vector.broadcast %76 : vector<1x128xf32> to vector<8x128xf32>
    %78 = arith.addf %74, %77 : vector<8x128xf32>
    %cst_55 = arith.constant 0.000000e+00 : f32
    %79 = vector.broadcast %cst_55 : f32 to vector<8x128xf32>
    %80 = arith.maximumf %78, %79 : vector<8x128xf32>
    %81 = arith.truncf %80 : vector<8x128xf32> to vector<8x128xbf16>
    %c7 = arith.constant 7 : index
    %c0_56 = arith.constant 0 : index
    %c0_57 = arith.constant 0 : index
    %82 = vector.load %arg4[%c7, %c0_56, %c0_57] : memref<8x128x128xbf16, #tpu.memory_space<vmem>>, vector<1x128x128xbf16>
    %83 = vector.shape_cast %82 : vector<1x128x128xbf16> to vector<128x128xbf16>
    %cst_58 = arith.constant dense<0.000000e+00> : vector<8x128xf32>
    %84 = tpu.matmul %81, %83, %cst_58 {dimension_numbers = #tpu.dot_dimension_numbers<[1], [0], [0], [1], [0, 0, 1, 1], [], []>} : vector<8x128xbf16>, vector<128x128xbf16>, vector<8x128xf32> -> vector<8x128xf32>
    %c7_59 = arith.constant 7 : index
    %c0_60 = arith.constant 0 : index
    %c0_61 = arith.constant 0 : index
    %85 = vector.load %arg5[%c7_59, %c0_60, %c0_61] : memref<8x1x128xf32, #tpu.memory_space<vmem>>, vector<1x1x128xf32>
    %86 = vector.shape_cast %85 : vector<1x1x128xf32> to vector<1x128xf32>
    %87 = vector.broadcast %86 : vector<1x128xf32> to vector<8x128xf32>
    %88 = arith.addf %84, %87 : vector<8x128xf32>
    %cst_62 = arith.constant 0.000000e+00 : f32
    %89 = vector.broadcast %cst_62 : f32 to vector<8x128xf32>
    %90 = arith.maximumf %88, %89 : vector<8x128xf32>
    %91 = arith.truncf %90 : vector<8x128xf32> to vector<8x128xbf16>
    %c0_63 = arith.constant 0 : index
    %c0_64 = arith.constant 0 : index
    %92 = vector.load %arg6[%c0_63, %c0_64] : memref<128x128xbf16, #tpu.memory_space<vmem>>, vector<128x128xbf16>
    %cst_65 = arith.constant dense<0.000000e+00> : vector<8x128xf32>
    %93 = tpu.matmul %91, %92, %cst_65 {dimension_numbers = #tpu.dot_dimension_numbers<[1], [0], [0], [1], [0, 0, 1, 1], [], []>} : vector<8x128xbf16>, vector<128x128xbf16>, vector<8x128xf32> -> vector<8x128xf32>
    %c0_66 = arith.constant 0 : index
    %c0_67 = arith.constant 0 : index
    %94 = vector.load %arg7[%c0_66, %c0_67] : memref<1x128xf32, #tpu.memory_space<vmem>>, vector<1x128xf32>
    %95 = vector.broadcast %94 : vector<1x128xf32> to vector<8x128xf32>
    %96 = arith.addf %93, %95 : vector<8x128xf32>
    %c0_68 = arith.constant 0 : index
    %c0_69 = arith.constant 0 : index
    %97 = vector.load %arg8[%c0_68, %c0_69] : memref<8x128xf32, #tpu.memory_space<vmem>>, vector<8x128xf32>
    tpu.vector_store %arg8[%c0_68, %c0_69], %96 {strides = array<i32>} : memref<8x128xf32, #tpu.memory_space<vmem>>, vector<8x128xf32>,
    return
  }
  func.func @transform_0(%arg0: i32) -> (i32, i32) {
    %c0_i32 = arith.constant 0 : i32
    %c0_i32_0 = arith.constant 0 : i32
    return %arg0, %c0_i32 : i32, i32
  }
  func.func @transform_1(%arg0: i32) -> (i32, i32) {
    %c0_i32 = arith.constant 0 : i32
    %c0_i32_0 = arith.constant 0 : i32
    %c0_i32_1 = arith.constant 0 : i32
    return %c0_i32, %c0_i32_0 : i32, i32
  }
  func.func @transform_2(%arg0: i32) -> (i32, i32) {
    %c0_i32 = arith.constant 0 : i32
    %c0_i32_0 = arith.constant 0 : i32
    %c0_i32_1 = arith.constant 0 : i32
    return %c0_i32, %c0_i32_0 : i32, i32
  }
  func.func @transform_3(%arg0: i32) -> (i32, i32, i32) {
    %c0_i32 = arith.constant 0 : i32
    %c0_i32_0 = arith.constant 0 : i32
    %c0_i32_1 = arith.constant 0 : i32
    %c0_i32_2 = arith.constant 0 : i32
    return %c0_i32, %c0_i32_0, %c0_i32_1 : i32, i32, i32
  }
  func.func @transform_4(%arg0: i32) -> (i32, i32, i32) {
    %c0_i32 = arith.constant 0 : i32
    %c0_i32_0 = arith.constant 0 : i32
    %c0_i32_1 = arith.constant 0 : i32
    %c0_i32_2 = arith.constant 0 : i32
    return %c0_i32, %c0_i32_0, %c0_i32_1 : i32, i32, i32
  }
  func.func @transform_5(%arg0: i32) -> (i32, i32) {
    %c0_i32 = arith.constant 0 : i32
    %c0_i32_0 = arith.constant 0 : i32
    %c0_i32_1 = arith.constant 0 : i32
    return %c0_i32, %c0_i32_0 : i32, i32
  }
  func.func @transform_6(%arg0: i32) -> (i32, i32) {
    %c0_i32 = arith.constant 0 : i32
    %c0_i32_0 = arith.constant 0 : i32
    %c0_i32_1 = arith.constant 0 : i32
    return %c0_i32, %c0_i32_0 : i32, i32
  }
  func.func @transform_7(%arg0: i32) -> (i32, i32) {
    %c0_i32 = arith.constant 0 : i32
    %c0_i32_0 = arith.constant 0 : i32
    return %arg0, %c0_i32 : i32, i32
  }
}

module attributes {stable_mosaic.version = 11 : i64} {
  func.func @res_linear_kernel(%arg0: i32, %arg1: memref<8x128xbf16, #tpu.memory_space<vmem>>, %arg2: memref<128x128xbf16, #tpu.memory_space<vmem>>, %arg3: memref<1x128xf32, #tpu.memory_space<vmem>>, %arg4: memref<8x128x128xbf16, #tpu.memory_space<vmem>>, %arg5: memref<8x1x128xf32, #tpu.memory_space<vmem>>, %arg6: memref<128x128xbf16, #tpu.memory_space<vmem>>, %arg7: memref<1x128xf32, #tpu.memory_space<vmem>>, %arg8: memref<8x128xf32, #tpu.memory_space<vmem>>) attributes {dimension_semantics = [#tpu.dimension_semantics<arbitrary>], iteration_bounds = array<i64: 1>, scalar_prefetch = 0 : i64, scratch_operands = 0 : i64, tpu.core_type = #tpu.core_type<tc>, window_params = [{transform_indices = @transform_0, window_bounds = array<i64: 8, 128>}, {pipeline_mode = #tpu.pipeline_mode<synchronous>, transform_indices = @transform_1, window_bounds = array<i64: 128, 128>}, {pipeline_mode = #tpu.pipeline_mode<synchronous>, transform_indices = @transform_2, window_bounds = array<i64: 1, 128>}, {pipeline_mode = #tpu.pipeline_mode<synchronous>, transform_indices = @transform_3, window_bounds = array<i64: 8, 128, 128>}, {pipeline_mode = #tpu.pipeline_mode<synchronous>, transform_indices = @transform_4, window_bounds = array<i64: 8, 1, 128>}, {pipeline_mode = #tpu.pipeline_mode<synchronous>, transform_indices = @transform_5, window_bounds = array<i64: 128, 128>}, {pipeline_mode = #tpu.pipeline_mode<synchronous>, transform_indices = @transform_6, window_bounds = array<i64: 1, 128>}, {transform_indices = @transform_7, window_bounds = array<i64: 8, 128>}]} {
    %c0 = arith.constant 0 : index
    %c0_0 = arith.constant 0 : index
    %0 = vector.load %arg1[%c0, %c0_0] : memref<8x128xbf16, #tpu.memory_space<vmem>>, vector<8x128xbf16>
    %c0_1 = arith.constant 0 : index
    %c0_2 = arith.constant 0 : index
    %1 = vector.load %arg2[%c0_1, %c0_2] : memref<128x128xbf16, #tpu.memory_space<vmem>>, vector<128x128xbf16>
    %cst = arith.constant dense<0.000000e+00> : vector<8x128xf32>
    %2 = tpu.matmul %0, %1, %cst {dimension_numbers = #tpu.dot_dimension_numbers<[1], [0], [0], [1], [0, 0, 1, 1], [], []>} : vector<8x128xbf16>, vector<128x128xbf16>, vector<8x128xf32> -> vector<8x128xf32>
    %c0_3 = arith.constant 0 : index
    %c0_4 = arith.constant 0 : index
    %3 = vector.load %arg3[%c0_3, %c0_4] : memref<1x128xf32, #tpu.memory_space<vmem>>, vector<1x128xf32>
    %4 = vector.broadcast %3 : vector<1x128xf32> to vector<8x128xf32>
    %5 = arith.addf %2, %4 : vector<8x128xf32>
    %cst_5 = arith.constant 0.000000e+00 : f32
    %6 = vector.broadcast %cst_5 : f32 to vector<8x128xf32>
    %7 = arith.maximumf %5, %6 : vector<8x128xf32>
    %8 = arith.truncf %7 : vector<8x128xf32> to vector<8x128xbf16>
    %c0_6 = arith.constant 0 : index
    %c0_7 = arith.constant 0 : index
    %c0_8 = arith.constant 0 : index
    %9 = vector.load %arg4[%c0_6, %c0_7, %c0_8] : memref<8x128x128xbf16, #tpu.memory_space<vmem>>, vector<1x128x128xbf16>
    %10 = vector.shape_cast %9 : vector<1x128x128xbf16> to vector<128x128xbf16>
    %cst_9 = arith.constant dense<0.000000e+00> : vector<8x128xf32>
    %11 = tpu.matmul %8, %10, %cst_9 {dimension_numbers = #tpu.dot_dimension_numbers<[1], [0], [0], [1], [0, 0, 1, 1], [], []>} : vector<8x128xbf16>, vector<128x128xbf16>, vector<8x128xf32> -> vector<8x128xf32>
    %c0_10 = arith.constant 0 : index
    %c0_11 = arith.constant 0 : index
    %c0_12 = arith.constant 0 : index
    %12 = vector.load %arg5[%c0_10, %c0_11, %c0_12] : memref<8x1x128xf32, #tpu.memory_space<vmem>>, vector<1x1x128xf32>
    %13 = vector.shape_cast %12 : vector<1x1x128xf32> to vector<1x128xf32>
    %14 = vector.broadcast %13 : vector<1x128xf32> to vector<8x128xf32>
    %15 = arith.addf %11, %14 : vector<8x128xf32>
    %cst_13 = arith.constant 0.000000e+00 : f32
    %16 = vector.broadcast %cst_13 : f32 to vector<8x128xf32>
    %17 = arith.maximumf %15, %16 : vector<8x128xf32>
    %18 = arith.truncf %17 : vector<8x128xf32> to vector<8x128xbf16>
    %c1 = arith.constant 1 : index
    %c0_14 = arith.constant 0 : index
    %c0_15 = arith.constant 0 : index
    %19 = vector.load %arg4[%c1, %c0_14, %c0_15] : memref<8x128x128xbf16, #tpu.memory_space<vmem>>, vector<1x128x128xbf16>
    %20 = vector.shape_cast %19 : vector<1x128x128xbf16> to vector<128x128xbf16>
    %cst_16 = arith.constant dense<0.000000e+00> : vector<8x128xf32>
    %21 = tpu.matmul %18, %20, %cst_16 {dimension_numbers = #tpu.dot_dimension_numbers<[1], [0], [0], [1], [0, 0, 1, 1], [], []>} : vector<8x128xbf16>, vector<128x128xbf16>, vector<8x128xf32> -> vector<8x128xf32>
    %c1_17 = arith.constant 1 : index
    %c0_18 = arith.constant 0 : index
    %c0_19 = arith.constant 0 : index
    %22 = vector.load %arg5[%c1_17, %c0_18, %c0_19] : memref<8x1x128xf32, #tpu.memory_space<vmem>>, vector<1x1x128xf32>
    %23 = vector.shape_cast %22 : vector<1x1x128xf32> to vector<1x128xf32>
    %24 = vector.broadcast %23 : vector<1x128xf32> to vector<8x128xf32>
    %25 = arith.addf %21, %24 : vector<8x128xf32>
    %cst_20 = arith.constant 0.000000e+00 : f32
    %26 = vector.broadcast %cst_20 : f32 to vector<8x128xf32>
    %27 = arith.maximumf %25, %26 : vector<8x128xf32>
    %28 = arith.addf %27, %7 : vector<8x128xf32>
    %29 = arith.truncf %28 : vector<8x128xf32> to vector<8x128xbf16>
    %c2 = arith.constant 2 : index
    %c0_21 = arith.constant 0 : index
    %c0_22 = arith.constant 0 : index
    %30 = vector.load %arg4[%c2, %c0_21, %c0_22] : memref<8x128x128xbf16, #tpu.memory_space<vmem>>, vector<1x128x128xbf16>
    %31 = vector.shape_cast %30 : vector<1x128x128xbf16> to vector<128x128xbf16>
    %cst_23 = arith.constant dense<0.000000e+00> : vector<8x128xf32>
    %32 = tpu.matmul %29, %31, %cst_23 {dimension_numbers = #tpu.dot_dimension_numbers<[1], [0], [0], [1], [0, 0, 1, 1], [], []>} : vector<8x128xbf16>, vector<128x128xbf16>, vector<8x128xf32> -> vector<8x128xf32>
    %c2_24 = arith.constant 2 : index
    %c0_25 = arith.constant 0 : index
    %c0_26 = arith.constant 0 : index
    %33 = vector.load %arg5[%c2_24, %c0_25, %c0_26] : memref<8x1x128xf32, #tpu.memory_space<vmem>>, vector<1x1x128xf32>
    %34 = vector.shape_cast %33 : vector<1x1x128xf32> to vector<1x128xf32>
    %35 = vector.broadcast %34 : vector<1x128xf32> to vector<8x128xf32>
    %36 = arith.addf %32, %35 : vector<8x128xf32>
    %cst_27 = arith.constant 0.000000e+00 : f32
    %37 = vector.broadcast %cst_27 : f32 to vector<8x128xf32>
    %38 = arith.maximumf %36, %37 : vector<8x128xf32>
    %39 = arith.truncf %38 : vector<8x128xf32> to vector<8x128xbf16>
    %c3 = arith.constant 3 : index
    %c0_28 = arith.constant 0 : index
    %c0_29 = arith.constant 0 : index
    %40 = vector.load %arg4[%c3, %c0_28, %c0_29] : memref<8x128x128xbf16, #tpu.memory_space<vmem>>, vector<1x128x128xbf16>
    %41 = vector.shape_cast %40 : vector<1x128x128xbf16> to vector<128x128xbf16>
    %cst_30 = arith.constant dense<0.000000e+00> : vector<8x128xf32>
    %42 = tpu.matmul %39, %41, %cst_30 {dimension_numbers = #tpu.dot_dimension_numbers<[1], [0], [0], [1], [0, 0, 1, 1], [], []>} : vector<8x128xbf16>, vector<128x128xbf16>, vector<8x128xf32> -> vector<8x128xf32>
    %c3_31 = arith.constant 3 : index
    %c0_32 = arith.constant 0 : index
    %c0_33 = arith.constant 0 : index
    %43 = vector.load %arg5[%c3_31, %c0_32, %c0_33] : memref<8x1x128xf32, #tpu.memory_space<vmem>>, vector<1x1x128xf32>
    %44 = vector.shape_cast %43 : vector<1x1x128xf32> to vector<1x128xf32>
    %45 = vector.broadcast %44 : vector<1x128xf32> to vector<8x128xf32>
    %46 = arith.addf %42, %45 : vector<8x128xf32>
    %cst_34 = arith.constant 0.000000e+00 : f32
    %47 = vector.broadcast %cst_34 : f32 to vector<8x128xf32>
    %48 = arith.maximumf %46, %47 : vector<8x128xf32>
    %49 = arith.addf %48, %38 : vector<8x128xf32>
    %50 = arith.truncf %49 : vector<8x128xf32> to vector<8x128xbf16>
    %c4 = arith.constant 4 : index
    %c0_35 = arith.constant 0 : index
    %c0_36 = arith.constant 0 : index
    %51 = vector.load %arg4[%c4, %c0_35, %c0_36] : memref<8x128x128xbf16, #tpu.memory_space<vmem>>, vector<1x128x128xbf16>
    %52 = vector.shape_cast %51 : vector<1x128x128xbf16> to vector<128x128xbf16>
    %cst_37 = arith.constant dense<0.000000e+00> : vector<8x128xf32>
    %53 = tpu.matmul %50, %52, %cst_37 {dimension_numbers = #tpu.dot_dimension_numbers<[1], [0], [0], [1], [0, 0, 1, 1], [], []>} : vector<8x128xbf16>, vector<128x128xbf16>, vector<8x128xf32> -> vector<8x128xf32>
    %c4_38 = arith.constant 4 : index
    %c0_39 = arith.constant 0 : index
    %c0_40 = arith.constant 0 : index
    %54 = vector.load %arg5[%c4_38, %c0_39, %c0_40] : memref<8x1x128xf32, #tpu.memory_space<vmem>>, vector<1x1x128xf32>
    %55 = vector.shape_cast %54 : vector<1x1x128xf32> to vector<1x128xf32>
    %56 = vector.broadcast %55 : vector<1x128xf32> to vector<8x128xf32>
    %57 = arith.addf %53, %56 : vector<8x128xf32>
    %cst_41 = arith.constant 0.000000e+00 : f32
    %58 = vector.broadcast %cst_41 : f32 to vector<8x128xf32>
    %59 = arith.maximumf %57, %58 : vector<8x128xf32>
    %60 = arith.truncf %59 : vector<8x128xf32> to vector<8x128xbf16>
    %c5 = arith.constant 5 : index
    %c0_42 = arith.constant 0 : index
    %c0_43 = arith.constant 0 : index
    %61 = vector.load %arg4[%c5, %c0_42, %c0_43] : memref<8x128x128xbf16, #tpu.memory_space<vmem>>, vector<1x128x128xbf16>
    %62 = vector.shape_cast %61 : vector<1x128x128xbf16> to vector<128x128xbf16>
    %cst_44 = arith.constant dense<0.000000e+00> : vector<8x128xf32>
    %63 = tpu.matmul %60, %62, %cst_44 {dimension_numbers = #tpu.dot_dimension_numbers<[1], [0], [0], [1], [0, 0, 1, 1], [], []>} : vector<8x128xbf16>, vector<128x128xbf16>, vector<8x128xf32> -> vector<8x128xf32>
    %c5_45 = arith.constant 5 : index
    %c0_46 = arith.constant 0 : index
    %c0_47 = arith.constant 0 : index
    %64 = vector.load %arg5[%c5_45, %c0_46, %c0_47] : memref<8x1x128xf32, #tpu.memory_space<vmem>>, vector<1x1x128xf32>
    %65 = vector.shape_cast %64 : vector<1x1x128xf32> to vector<1x128xf32>
    %66 = vector.broadcast %65 : vector<1x128xf32> to vector<8x128xf32>
    %67 = arith.addf %63, %66 : vector<8x128xf32>
    %cst_48 = arith.constant 0.000000e+00 : f32
    %68 = vector.broadcast %cst_48 : f32 to vector<8x128xf32>
    %69 = arith.maximumf %67, %68 : vector<8x128xf32>
    %70 = arith.addf %69, %59 : vector<8x128xf32>
    %71 = arith.truncf %70 : vector<8x128xf32> to vector<8x128xbf16>
    %c6 = arith.constant 6 : index
    %c0_49 = arith.constant 0 : index
    %c0_50 = arith.constant 0 : index
    %72 = vector.load %arg4[%c6, %c0_49, %c0_50] : memref<8x128x128xbf16, #tpu.memory_space<vmem>>, vector<1x128x128xbf16>
    %73 = vector.shape_cast %72 : vector<1x128x128xbf16> to vector<128x128xbf16>
    %cst_51 = arith.constant dense<0.000000e+00> : vector<8x128xf32>
    %74 = tpu.matmul %71, %73, %cst_51 {dimension_numbers = #tpu.dot_dimension_numbers<[1], [0], [0], [1], [0, 0, 1, 1], [], []>} : vector<8x128xbf16>, vector<128x128xbf16>, vector<8x128xf32> -> vector<8x128xf32>
    %c6_52 = arith.constant 6 : index
    %c0_53 = arith.constant 0 : index
    %c0_54 = arith.constant 0 : index
    %75 = vector.load %arg5[%c6_52, %c0_53, %c0_54] : memref<8x1x128xf32, #tpu.memory_space<vmem>>, vector<1x1x128xf32>
    %76 = vector.shape_cast %75 : vector<1x1x128xf32> to vector<1x128xf32>
    %77 = vector.broadcast %76 : vector<1x128xf32> to vector<8x128xf32>
    %78 = arith.addf %74, %77 : vector<8x128xf32>
    %cst_55 = arith.constant 0.000000e+00 : f32
    %79 = vector.broadcast %cst_55 : f32 to vector<8x128xf32>
    %80 = arith.maximumf %78, %79 : vector<8x128xf32>
    %81 = arith.truncf %80 : vector<8x128xf32> to vector<8x128xbf16>
    %c7 = arith.constant 7 : index
    %c0_56 = arith.constant 0 : index
    %c0_57 = arith.constant 0 : index
    %82 = vector.load %arg4[%c7, %c0_56, %c0_57] : memref<8x128x128xbf16, #tpu.memory_space<vmem>>, vector<1x128x128xbf16>
    %83 = vector.shape_cast %82 : vector<1x128x128xbf16> to vector<128x128xbf16>
    %cst_58 = arith.constant dense<0.000000e+00> : vector<8x128xf32>
    %84 = tpu.matmul %81, %83, %cst_58 {dimension_numbers = #tpu.dot_dimension_numbers<[1], [0], [0], [1], [0, 0, 1, 1], [], []>} : vector<8x128xbf16>, vector<128x128xbf16>, vector<8x128xf32> -> vector<8x128xf32>
    %c7_59 = arith.constant 7 : index
    %c0_60 = arith.constant 0 : index
    %c0_61 = arith.constant 0 : index
    %85 = vector.load %arg5[%c7_59, %c0_60, %c0_61] : memref<8x1x128xf32, #tpu.memory_space<vmem>>, vector<1x1x128xf32>
    %86 = vector.shape_cast %85 : vector<1x1x128xf32> to vector<1x128xf32>
    %87 = vector.broadcast %86 : vector<1x128xf32> to vector<8x128xf32>
    %88 = arith.addf %84, %87 : vector<8x128xf32>
    %cst_62 = arith.constant 0.000000e+00 : f32
    %89 = vector.broadcast %cst_62 : f32 to vector<8x128xf32>
    %90 = arith.maximumf %88, %89 : vector<8x128xf32>
    %91 = arith.truncf %90 : vector<8x128xf32> to vector<8x128xbf16>
    %c0_63 = arith.constant 0 : index
    %c0_64 = arith.constant 0 : index
    %92 = vector.load %arg6[%c0_63, %c0_64] : memref<128x128xbf16, #tpu.memory_space<vmem>>, vector<128x128xbf16>
    %cst_65 = arith.constant dense<0.000000e+00> : vector<8x128xf32>
    %93 = tpu.matmul %91, %92, %cst_65 {dimension_numbers = #tpu.dot_dimension_numbers<[1], [0], [0], [1], [0, 0, 1, 1], [], []>} : vector<8x128xbf16>, vector<128x128xbf16>, vector<8x128xf32> -> vector<8x128xf32>
    %c0_66 = arith.constant 0 : index
    %c0_67 = arith.constant 0 : index
    %94 = vector.load %arg7[%c0_66, %c0_67] : memref<1x128xf32, #tpu.memory_space<vmem>>, vector<1x128xf32>
    %95 = vector.broadcast %94 : vector<1x128xf32> to vector<8x128xf32>
    %96 = arith.addf %93, %95 : vector<8x128xf32>
    %c0_68 = arith.constant 0 : index
    %c0_69 = arith.constant 0 : index
    %97 = vector.load %arg8[%c0_68, %c0_69] : memref<8x128xf32, #tpu.memory_space<vmem>>, vector<8x128xf32>
    tpu.vector_store %arg8[%c0_68, %c0_69], %96 {strides = array<i32>} : memref<8x128xf32, #tpu.memory_space<vmem>>, vector<8x128xf32>,
    return
  }
  func.func @transform_0(%arg0: i32) -> (i32, i32) {
    %c0_i32 = arith.constant 0 : i32
    %c0_i32_0 = arith.constant 0 : i32
    return %arg0, %c0_i32 : i32, i32
  }
  func.func @transform_1(%arg0: i32) -> (i32, i32) {
    %c0_i32 = arith.constant 0 : i32
    %c0_i32_0 = arith.constant 0 : i32
    %c0_i32_1 = arith.constant 0 : i32
    return %c0_i32, %c0_i32_0 : i32, i32
  }
  func.func @transform_2(%arg0: i32) -> (i32, i32) {
    %c0_i32 = arith.constant 0 : i32
    %c0_i32_0 = arith.constant 0 : i32
    %c0_i32_1 = arith.constant 0 : i32
    return %c0_i32, %c0_i32_0 : i32, i32
  }
  func.func @transform_3(%arg0: i32) -> (i32, i32, i32) {
    %c0_i32 = arith.constant 0 : i32
    %c0_i32_0 = arith.constant 0 : i32
    %c0_i32_1 = arith.constant 0 : i32
    %c0_i32_2 = arith.constant 0 : i32
    return %c0_i32, %c0_i32_0, %c0_i32_1 : i32, i32, i32
  }
  func.func @transform_4(%arg0: i32) -> (i32, i32, i32) {
    %c0_i32 = arith.constant 0 : i32
    %c0_i32_0 = arith.constant 0 : i32
    %c0_i32_1 = arith.constant 0 : i32
    %c0_i32_2 = arith.constant 0 : i32
    return %c0_i32, %c0_i32_0, %c0_i32_1 : i32, i32, i32
  }
  func.func @transform_5(%arg0: i32) -> (i32, i32) {
    %c0_i32 = arith.constant 0 : i32
    %c0_i32_0 = arith.constant 0 : i32
    %c0_i32_1 = arith.constant 0 : i32
    return %c0_i32, %c0_i32_0 : i32, i32
  }
  func.func @transform_6(%arg0: i32) -> (i32, i32) {
    %c0_i32 = arith.constant 0 : i32
    %c0_i32_0 = arith.constant 0 : i32
    %c0_i32_1 = arith.constant 0 : i32
    return %c0_i32, %c0_i32_0 : i32, i32
  }
  func.func @transform_7(%arg0: i32) -> (i32, i32) {
    %c0_i32 = arith.constant 0 : i32
    %c0_i32_0 = arith.constant 0 : i32
    return %arg0, %c0_i32 : i32, i32
  }
}

</mosaic_0001>

<llo_original>
// kernel: tpu_custom_call.1
$region0: #{tpu_custom_call.1}
  #allocation0 [shape = 'u32[]', space=smem, size = 0x4, offset = 0x4, fixed_abs, tag = 'smem constant byte address 0x4 - core index']
  #allocation1 [shape = 'u32[72,128]{1,0:T(1,128)}', space=vmem, size = 0x9000, scoped, tag = 'internal scratch']
  %s0 = inlined_call_operand.hbm [shape: bf16[8,128], index: 0, kind: input, shape index: {}]
  %s1 = inlined_call_operand.hbm [shape: bf16[128,128], index: 1, kind: input, shape index: {}]
  %s2 = inlined_call_operand.vmem [shape: f32[1,128], index: 2, kind: input, shape index: {}]
  %s3 = inlined_call_operand.hbm [shape: bf16[8,128,128], index: 3, kind: input, shape index: {}]
  %s4 = inlined_call_operand.hbm [shape: f32[8,1,128], index: 4, kind: input, shape index: {}]
  %s5 = inlined_call_operand.hbm [shape: bf16[128,128], index: 5, kind: input, shape index: {}]
  %s6 = inlined_call_operand.vmem [shape: f32[1,128], index: 6, kind: input, shape index: {}]
  %s7 = inlined_call_operand.hbm [shape: f32[8,128], index: 7, kind: output, shape index: {}]
  %s8 = sld [smem:[#allocation0]]
  $region58: #{tpu_custom_call.1} parent=0
    _
  %s10 = ssub.s32 1, %s8
  %s11 = scalar_select 0, %s10, %s8
  $region1: #{tpu_custom_call.1} parent=0
    #allocation2 [shape = 'u8[2048]{0}', space=vmem, size = 0x800, scoped, tag = 'input window, operand 0, single buffered']
    #allocation3 [shape = 's32[1]{0}', space=sflag, size = 0x4, scoped, tag = 'scoped memory for tpu_custom_call.1']
    #allocation4 [shape = 's32[1]{0}', space=sflag, size = 0x4, scoped, tag = 'scoped memory for tpu_custom_call.1']
    #allocation5 [shape = 'u8[32768]{0}', space=vmem, size = 0x8000, scoped, tag = 'input window, operand 1, single buffered']
    #allocation6 [shape = 's32[1]{0}', space=sflag, size = 0x4, scoped, tag = 'scoped memory for tpu_custom_call.1']
    #allocation7 [shape = 'u8[262144]{0}', space=vmem, size = 0x40000, scoped, tag = 'input window, operand 3, single buffered']
    #allocation8 [shape = 'u8[4096]{0}', space=vmem, size = 0x1000, scoped, tag = 'input window, operand 4, single buffered']
    #allocation9 [shape = 's32[1]{0}', space=sflag, size = 0x4, scoped, tag = 'scoped memory for tpu_custom_call.1']
    #allocation10 [shape = 'u8[32768]{0}', space=vmem, size = 0x8000, scoped, tag = 'input window, operand 5, single buffered']
    #allocation11 [shape = 'u8[4096]{0}', space=vmem, size = 0x1000, scoped, tag = 'output window, operand 0, single buffered']
    %12 = vsyncpa [#allocation3], 0
    %13 = vsyncpa [#allocation6], 0
    %14 = vsyncpa [#allocation9], 0
    %15 = vsyncpa [#allocation4], 0
    // Predicated region
    $region2: #{tpu_custom_call.1} parent=1 // pred_check
      _
    $region3: #{tpu_custom_call.1} parent=1 // pred_check_branch
      %17 = sbr.rel (0) target = $region5
    $region4: #{tpu_custom_call.1} parent=1 // pred_region
      %19 = vsyncadd [#allocation3], 0
      %s21 = sshll.u32 %s0, 4
      %s22 = int_to_ptr.hbm [resolvable:$true] %s21
      %s23 = sshll.u32 [#allocation2], 4
      %s24 = int_to_ptr.vmem [resolvable:$true] %s23
      %26 = dma.hbm_to_vmem [thread:$0]  %s22, 64, %s24, [#allocation3]
    $region5: #{tpu_custom_call.1} parent=1 // pred_fallthru
      _
    // Predicated region
    $region6: #{tpu_custom_call.1} parent=1 // pred_check
      _
    $region7: #{tpu_custom_call.1} parent=1 // pred_check_branch
      %28 = sbr.rel (0) target = $region9
    $region8: #{tpu_custom_call.1} parent=1 // pred_region
      %30 = vsyncadd [#allocation6], 0
      %s31 = sshll.u32 %s1, 4
      %s32 = int_to_ptr.hbm [resolvable:$true] %s31
      %s33 = sshll.u32 [#allocation5], 4
      %s34 = int_to_ptr.vmem [resolvable:$true] %s33
      %39 = dma.hbm_to_vmem [thread:$0]  %s32, 1024, %s34, [#allocation6], 64, 64, 4
    $region9: #{tpu_custom_call.1} parent=1 // pred_fallthru
      _
    // Predicated region
    $region10: #{tpu_custom_call.1} parent=1 // pred_check
      _
    $region11: #{tpu_custom_call.1} parent=1 // pred_check_branch
      %41 = sbr.rel (0) target = $region13
    $region12: #{tpu_custom_call.1} parent=1 // pred_region
      _
    $region13: #{tpu_custom_call.1} parent=1 // pred_fallthru
      _
    // Predicated region
    $region14: #{tpu_custom_call.1} parent=1 // pred_check
      _
    $region15: #{tpu_custom_call.1} parent=1 // pred_check_branch
      %43 = sbr.rel (0) target = $region17
    $region16: #{tpu_custom_call.1} parent=1 // pred_region
      %45 = vsyncadd [#allocation6], 0
      %s46 = sshll.u32 %s3, 4
      %s47 = int_to_ptr.hbm [resolvable:$true] %s46
      %s48 = sshll.u32 [#allocation7], 4
      %s49 = int_to_ptr.vmem [resolvable:$true] %s48
      %54 = dma.hbm_to_vmem [thread:$0]  %s47, 8192, %s49, [#allocation6], 64, 64, 4
    $region17: #{tpu_custom_call.1} parent=1 // pred_fallthru
      _
    // Predicated region
    $region18: #{tpu_custom_call.1} parent=1 // pred_check
      _
    $region19: #{tpu_custom_call.1} parent=1 // pred_check_branch
      %56 = sbr.rel (0) target = $region21
    $region20: #{tpu_custom_call.1} parent=1 // pred_region
      %58 = vsyncadd [#allocation9], 0
      %s59 = sshll.u32 %s4, 4
      %s60 = int_to_ptr.hbm [resolvable:$true] %s59
      %s61 = sshll.u32 [#allocation8], 4
      %s62 = int_to_ptr.vmem [resolvable:$true] %s61
      %67 = dma.hbm_to_vmem [thread:$0]  %s60, 128, %s62, [#allocation9], 16, 16, 1
    $region21: #{tpu_custom_call.1} parent=1 // pred_fallthru
      _
    // Predicated region
    $region22: #{tpu_custom_call.1} parent=1 // pred_check
      _
    $region23: #{tpu_custom_call.1} parent=1 // pred_check_branch
      %69 = sbr.rel (0) target = $region25
    $region24: #{tpu_custom_call.1} parent=1 // pred_region
      %71 = vsyncadd [#allocation9], 0
      %s72 = sshll.u32 %s5, 4
      %s73 = int_to_ptr.hbm [resolvable:$true] %s72
      %s74 = sshll.u32 [#allocation10], 4
      %s75 = int_to_ptr.vmem [resolvable:$true] %s74
      %80 = dma.hbm_to_vmem [thread:$0]  %s73, 1024, %s75, [#allocation9], 64, 64, 4
    $region25: #{tpu_custom_call.1} parent=1 // pred_fallthru
      _
    // Predicated region
    $region26: #{tpu_custom_call.1} parent=1 // pred_check
      _
    $region27: #{tpu_custom_call.1} parent=1 // pred_check_branch
      %82 = sbr.rel (0) target = $region29
    $region28: #{tpu_custom_call.1} parent=1 // pred_region
      _
    $region29: #{tpu_custom_call.1} parent=1 // pred_fallthru
      _
    // Predicated region
    $region30: #{tpu_custom_call.1} parent=1 // pred_check
      _
    $region31: #{tpu_custom_call.1} parent=1 // pred_check_branch
      %84 = sbr.rel (0) target = $region33
    $region32: #{tpu_custom_call.1} parent=1 // pred_region
      %86 = dma.done [#allocation3], 64
    $region33: #{tpu_custom_call.1} parent=1 // pred_fallthru
      _
    // Predicated region
    $region34: #{tpu_custom_call.1} parent=1 // pred_check
      _
    $region35: #{tpu_custom_call.1} parent=1 // pred_check_branch
      %88 = sbr.rel (0) target = $region37
    $region36: #{tpu_custom_call.1} parent=1 // pred_region
      %90 = dma.done [#allocation6], 1024
    $region37: #{tpu_custom_call.1} parent=1 // pred_fallthru
      _
    // Predicated region
    $region38: #{tpu_custom_call.1} parent=1 // pred_check
      _
    $region39: #{tpu_custom_call.1} parent=1 // pred_check_branch
      %92 = sbr.rel (0) target = $region41
    $region40: #{tpu_custom_call.1} parent=1 // pred_region
      %94 = dma.done [#allocation6], 8192
    $region41: #{tpu_custom_call.1} parent=1 // pred_fallthru
      _
    // Predicated region
    $region42: #{tpu_custom_call.1} parent=1 // pred_check
      _
    $region43: #{tpu_custom_call.1} parent=1 // pred_check_branch
      %96 = sbr.rel (0) target = $region45
    $region44: #{tpu_custom_call.1} parent=1 // pred_region
      %98 = dma.done [#allocation9], 128
    $region45: #{tpu_custom_call.1} parent=1 // pred_fallthru
      _
    // Predicated region
    $region46: #{tpu_custom_call.1} parent=1 // pred_check
      _
    $region47: #{tpu_custom_call.1} parent=1 // pred_check_branch
      %100 = sbr.rel (0) target = $region49
    $region48: #{tpu_custom_call.1} parent=1 // pred_region
      %102 = dma.done [#allocation9], 1024
    $region49: #{tpu_custom_call.1} parent=1 // pred_fallthru
      _
    %v103 = vld [vmem:[#allocation2] sm:$0xf]
    %v104 = vld [vmem:[#allocation5] sm:$0xf]
    %v105 = vld [vmem:[#allocation5 + $0x4] sm:$0xf]
    %v106 = vld [vmem:[#allocation5 + $0x8] sm:$0xf]
    %v107 = vld [vmem:[#allocation5 + $0xc] sm:$0xf]
    %v108 = vld [vmem:[#allocation5 + $0x10] sm:$0xf]
    %v109 = vld [vmem:[#allocation5 + $0x14] sm:$0xf]
    %v110 = vld [vmem:[#allocation5 + $0x18] sm:$0xf]
    %v111 = vld [vmem:[#allocation5 + $0x1c] sm:$0xf]
    %v112 = vld [vmem:[#allocation5 + $0x20] sm:$0xf]
    %v113 = vld [vmem:[#allocation5 + $0x24] sm:$0xf]
    %v114 = vld [vmem:[#allocation5 + $0x28] sm:$0xf]
    %v115 = vld [vmem:[#allocation5 + $0x2c] sm:$0xf]
    %v116 = vld [vmem:[#allocation5 + $0x30] sm:$0xf]
    %v117 = vld [vmem:[#allocation5 + $0x34] sm:$0xf]
    %v118 = vld [vmem:[#allocation5 + $0x38] sm:$0xf]
    %v119 = vld [vmem:[#allocation5 + $0x3c] sm:$0xf]
    %v120 = vld [vmem:[%s2] sm:$0x1]
    %v122 = vperm.slane %v120, 0
    %v140 = vunpack.c.l.b16 %v104
    %v141 = vunpack.c.l.b16 %v105
    %v142 = vunpack.c.l.b16 %v106
    %v143 = vunpack.c.l.b16 %v107
    %v144 = vunpack.c.l.b16 %v108
    %v145 = vunpack.c.l.b16 %v109
    %v146 = vunpack.c.l.b16 %v110
    %v147 = vunpack.c.l.b16 %v111
    %v148 = vunpack.c.l.b16 %v112
    %v149 = vunpack.c.l.b16 %v113
    %v150 = vunpack.c.l.b16 %v114
    %v151 = vunpack.c.l.b16 %v115
    %v152 = vunpack.c.l.b16 %v116
    %v153 = vunpack.c.l.b16 %v117
    %v154 = vunpack.c.l.b16 %v118
    %v155 = vunpack.c.l.b16 %v119
    %v156 = vpack.c.b16 %v141, %v140
    %v157 = vpack.c.b16 %v143, %v142
    %v158 = vpack.c.b16 %v145, %v144
    %v159 = vpack.c.b16 %v147, %v146
    %v160 = vpack.c.b16 %v149, %v148
    %v161 = vpack.c.b16 %v151, %v150
    %v162 = vpack.c.b16 %v153, %v152
    %v163 = vpack.c.b16 %v155, %v154
    %172 = vmatpush.bf16.msra.mxu0 %v163
    %173 = vmatpush.bf16.msra.mxu0 %v162
    %174 = vmatpush.bf16.msra.mxu0 %v161
    %175 = vmatpush.bf16.msra.mxu0 %v160
    %176 = vmatpush.bf16.msra.mxu0 %v159
    %177 = vmatpush.bf16.msra.mxu0 %v158
    %178 = vmatpush.bf16.msra.mxu0 %v157
    %179 = vmatpush.bf16.msra.mxu0 %v156
    %180 = vmatmul.bf16.gmra.mxu0 %v103
    %v181 = vpop.f32.mrf.mxu0
    %v182 = vadd.f32 %v122, %v181
    %v183 = vpop.f32.mrf.mxu0
    %184 = vdwg.mxu0
    %v185 = vmax.f32 %v182, 0.0
    %v186 = vpack.c.bf16 %v185, %v185
    %v187 = vld [vmem:[#allocation7] sm:$0xf]
    %v188 = vld [vmem:[#allocation7 + $0x4] sm:$0xf]
    %v189 = vld [vmem:[#allocation7 + $0x8] sm:$0xf]
    %v190 = vld [vmem:[#allocation7 + $0xc] sm:$0xf]
    %v191 = vld [vmem:[#allocation7 + $0x10] sm:$0xf]
    %v192 = vld [vmem:[#allocation7 + $0x14] sm:$0xf]
    %v193 = vld [vmem:[#allocation7 + $0x18] sm:$0xf]
    %v194 = vld [vmem:[#allocation7 + $0x1c] sm:$0xf]
    %v195 = vld [vmem:[#allocation7 + $0x20] sm:$0xf]
    %v196 = vld [vmem:[#allocation7 + $0x24] sm:$0xf]
    %v197 = vld [vmem:[#allocation7 + $0x28] sm:$0xf]
    %v198 = vld [vmem:[#allocation7 + $0x2c] sm:$0xf]
    %v199 = vld [vmem:[#allocation7 + $0x30] sm:$0xf]
    %v200 = vld [vmem:[#allocation7 + $0x34] sm:$0xf]
    %v201 = vld [vmem:[#allocation7 + $0x38] sm:$0xf]
    %v202 = vld [vmem:[#allocation7 + $0x3c] sm:$0xf]
    %v203 = vld [vmem:[#allocation8] sm:$0x1]
    %v205 = vperm.slane %v203, 0
    %v223 = vunpack.c.l.b16 %v187
    %v224 = vunpack.c.l.b16 %v188
    %v225 = vunpack.c.l.b16 %v189
    %v226 = vunpack.c.l.b16 %v190
    %v227 = vunpack.c.l.b16 %v191
    %v228 = vunpack.c.l.b16 %v192
    %v229 = vunpack.c.l.b16 %v193
    %v230 = vunpack.c.l.b16 %v194
    %v231 = vunpack.c.l.b16 %v195
    %v232 = vunpack.c.l.b16 %v196
    %v233 = vunpack.c.l.b16 %v197
    %v234 = vunpack.c.l.b16 %v198
    %v235 = vunpack.c.l.b16 %v199
    %v236 = vunpack.c.l.b16 %v200
    %v237 = vunpack.c.l.b16 %v201
    %v238 = vunpack.c.l.b16 %v202
    %v239 = vpack.c.b16 %v224, %v223
    %v240 = vpack.c.b16 %v226, %v225
    %v241 = vpack.c.b16 %v228, %v227
    %v242 = vpack.c.b16 %v230, %v229
    %v243 = vpack.c.b16 %v232, %v231
    %v244 = vpack.c.b16 %v234, %v233
    %v245 = vpack.c.b16 %v236, %v235
    %v246 = vpack.c.b16 %v238, %v237
    %255 = vmatpush.bf16.msra.mxu0 %v246
    %256 = vmatpush.bf16.msra.mxu0 %v245
    %257 = vmatpush.bf16.msra.mxu0 %v244
    %258 = vmatpush.bf16.msra.mxu0 %v243
    %259 = vmatpush.bf16.msra.mxu0 %v242
    %260 = vmatpush.bf16.msra.mxu0 %v241
    %261 = vmatpush.bf16.msra.mxu0 %v240
    %262 = vmatpush.bf16.msra.mxu0 %v239
    %263 = vmatmul.bf16.gmra.mxu0 %v186
    %v264 = vpop.f32.mrf.mxu0
    %v265 = vadd.f32 %v205, %v264
    %v266 = vpop.f32.mrf.mxu0
    %267 = vdwg.mxu0
    %v268 = vmax.f32 %v265, 0.0
    %v269 = vpack.c.bf16 %v268, %v268
    %s270 = scalar_lea.vmem [#allocation7], 64
    %v271 = vld [vmem:[%s270] sm:$0xf]
    %v272 = vld [vmem:[%s270 + $0x4] sm:$0xf]
    %v273 = vld [vmem:[%s270 + $0x8] sm:$0xf]
    %v274 = vld [vmem:[%s270 + $0xc] sm:$0xf]
    %v275 = vld [vmem:[%s270 + $0x10] sm:$0xf]
    %v276 = vld [vmem:[%s270 + $0x14] sm:$0xf]
    %v277 = vld [vmem:[%s270 + $0x18] sm:$0xf]
    %v278 = vld [vmem:[%s270 + $0x1c] sm:$0xf]
    %v279 = vld [vmem:[%s270 + $0x20] sm:$0xf]
    %v280 = vld [vmem:[%s270 + $0x24] sm:$0xf]
    %v281 = vld [vmem:[%s270 + $0x28] sm:$0xf]
    %v282 = vld [vmem:[%s270 + $0x2c] sm:$0xf]
    %v283 = vld [vmem:[%s270 + $0x30] sm:$0xf]
    %v284 = vld [vmem:[%s270 + $0x34] sm:$0xf]
    %v285 = vld [vmem:[%s270 + $0x38] sm:$0xf]
    %v286 = vld [vmem:[%s270 + $0x3c] sm:$0xf]
    %s287 = scalar_lea.vmem [#allocation8], 1
    %v288 = vld [vmem:[%s287] sm:$0x1]
    %v290 = vperm.slane %v288, 0
    %v308 = vunpack.c.l.b16 %v271
    %v309 = vunpack.c.l.b16 %v272
    %v310 = vunpack.c.l.b16 %v273
    %v311 = vunpack.c.l.b16 %v274
    %v312 = vunpack.c.l.b16 %v275
    %v313 = vunpack.c.l.b16 %v276
    %v314 = vunpack.c.l.b16 %v277
    %v315 = vunpack.c.l.b16 %v278
    %v316 = vunpack.c.l.b16 %v279
    %v317 = vunpack.c.l.b16 %v280
    %v318 = vunpack.c.l.b16 %v281
    %v319 = vunpack.c.l.b16 %v282
    %v320 = vunpack.c.l.b16 %v283
    %v321 = vunpack.c.l.b16 %v284
    %v322 = vunpack.c.l.b16 %v285
    %v323 = vunpack.c.l.b16 %v286
    %v324 = vpack.c.b16 %v309, %v308
    %v325 = vpack.c.b16 %v311, %v310
    %v326 = vpack.c.b16 %v313, %v312
    %v327 = vpack.c.b16 %v315, %v314
    %v328 = vpack.c.b16 %v317, %v316
    %v329 = vpack.c.b16 %v319, %v318
    %v330 = vpack.c.b16 %v321, %v320
    %v331 = vpack.c.b16 %v323, %v322
    %340 = vmatpush.bf16.msra.mxu0 %v331
    %341 = vmatpush.bf16.msra.mxu0 %v330
    %342 = vmatpush.bf16.msra.mxu0 %v329
    %343 = vmatpush.bf16.msra.mxu0 %v328
    %344 = vmatpush.bf16.msra.mxu0 %v327
    %345 = vmatpush.bf16.msra.mxu0 %v326
    %346 = vmatpush.bf16.msra.mxu0 %v325
    %347 = vmatpush.bf16.msra.mxu0 %v324
    %348 = vmatmul.bf16.gmra.mxu0 %v269
    %v349 = vpop.f32.mrf.mxu0
    %v350 = vadd.f32 %v290, %v349
    %v351 = vpop.f32.mrf.mxu0
    %352 = vdwg.mxu0
    %v353 = vmax.f32 %v350, 0.0
    %v354 = vadd.f32 %v353, %v185
    %v355 = vpack.c.bf16 %v354, %v354
    %s356 = scalar_lea.vmem [#allocation7], 128
    %v357 = vld [vmem:[%s356] sm:$0xf]
    %v358 = vld [vmem:[%s356 + $0x4] sm:$0xf]
    %v359 = vld [vmem:[%s356 + $0x8] sm:$0xf]
    %v360 = vld [vmem:[%s356 + $0xc] sm:$0xf]
    %v361 = vld [vmem:[%s356 + $0x10] sm:$0xf]
    %v362 = vld [vmem:[%s356 + $0x14] sm:$0xf]
    %v363 = vld [vmem:[%s356 + $0x18] sm:$0xf]
    %v364 = vld [vmem:[%s356 + $0x1c] sm:$0xf]
    %v365 = vld [vmem:[%s356 + $0x20] sm:$0xf]
    %v366 = vld [vmem:[%s356 + $0x24] sm:$0xf]
    %v367 = vld [vmem:[%s356 + $0x28] sm:$0xf]
    %v368 = vld [vmem:[%s356 + $0x2c] sm:$0xf]
    %v369 = vld [vmem:[%s356 + $0x30] sm:$0xf]
    %v370 = vld [vmem:[%s356 + $0x34] sm:$0xf]
    %v371 = vld [vmem:[%s356 + $0x38] sm:$0xf]
    %v372 = vld [vmem:[%s356 + $0x3c] sm:$0xf]
    %s373 = scalar_lea.vmem [#allocation8], 2
    %v374 = vld [vmem:[%s373] sm:$0x1]
    %v376 = vperm.slane %v374, 0
    %v394 = vunpack.c.l.b16 %v357
    %v395 = vunpack.c.l.b16 %v358
    %v396 = vunpack.c.l.b16 %v359
    %v397 = vunpack.c.l.b16 %v360
    %v398 = vunpack.c.l.b16 %v361
    %v399 = vunpack.c.l.b16 %v362
    %v400 = vunpack.c.l.b16 %v363
    %v401 = vunpack.c.l.b16 %v364
    %v402 = vunpack.c.l.b16 %v365
    %v403 = vunpack.c.l.b16 %v366
    %v404 = vunpack.c.l.b16 %v367
    %v405 = vunpack.c.l.b16 %v368
    %v406 = vunpack.c.l.b16 %v369
    %v407 = vunpack.c.l.b16 %v370
    %v408 = vunpack.c.l.b16 %v371
    %v409 = vunpack.c.l.b16 %v372
    %v410 = vpack.c.b16 %v395, %v394
    %v411 = vpack.c.b16 %v397, %v396
    %v412 = vpack.c.b16 %v399, %v398
    %v413 = vpack.c.b16 %v401, %v400
    %v414 = vpack.c.b16 %v403, %v402
    %v415 = vpack.c.b16 %v405, %v404
    %v416 = vpack.c.b16 %v407, %v406
    %v417 = vpack.c.b16 %v409, %v408
    %426 = vmatpush.bf16.msra.mxu0 %v417
    %427 = vmatpush.bf16.msra.mxu0 %v416
    %428 = vmatpush.bf16.msra.mxu0 %v415
    %429 = vmatpush.bf16.msra.mxu0 %v414
    %430 = vmatpush.bf16.msra.mxu0 %v413
    %431 = vmatpush.bf16.msra.mxu0 %v412
    %432 = vmatpush.bf16.msra.mxu0 %v411
    %433 = vmatpush.bf16.msra.mxu0 %v410
    %434 = vmatmul.bf16.gmra.mxu0 %v355
    %v435 = vpop.f32.mrf.mxu0
    %v436 = vadd.f32 %v376, %v435
    %v437 = vpop.f32.mrf.mxu0
    %438 = vdwg.mxu0
    %v439 = vmax.f32 %v436, 0.0
    %v440 = vpack.c.bf16 %v439, %v439
    %s441 = scalar_lea.vmem [#allocation7], 192
    %v442 = vld [vmem:[%s441] sm:$0xf]
    %v443 = vld [vmem:[%s441 + $0x4] sm:$0xf]
    %v444 = vld [vmem:[%s441 + $0x8] sm:$0xf]
    %v445 = vld [vmem:[%s441 + $0xc] sm:$0xf]
    %v446 = vld [vmem:[%s441 + $0x10] sm:$0xf]
    %v447 = vld [vmem:[%s441 + $0x14] sm:$0xf]
    %v448 = vld [vmem:[%s441 + $0x18] sm:$0xf]
    %v449 = vld [vmem:[%s441 + $0x1c] sm:$0xf]
    %v450 = vld [vmem:[%s441 + $0x20] sm:$0xf]
    %v451 = vld [vmem:[%s441 + $0x24] sm:$0xf]
    %v452 = vld [vmem:[%s441 + $0x28] sm:$0xf]
    %v453 = vld [vmem:[%s441 + $0x2c] sm:$0xf]
    %v454 = vld [vmem:[%s441 + $0x30] sm:$0xf]
    %v455 = vld [vmem:[%s441 + $0x34] sm:$0xf]
    %v456 = vld [vmem:[%s441 + $0x38] sm:$0xf]
    %v457 = vld [vmem:[%s441 + $0x3c] sm:$0xf]
    %s458 = scalar_lea.vmem [#allocation8], 3
    %v459 = vld [vmem:[%s458] sm:$0x1]
    %v461 = vperm.slane %v459, 0
    %v479 = vunpack.c.l.b16 %v442
    %v480 = vunpack.c.l.b16 %v443
    %v481 = vunpack.c.l.b16 %v444
    %v482 = vunpack.c.l.b16 %v445
    %v483 = vunpack.c.l.b16 %v446
    %v484 = vunpack.c.l.b16 %v447
    %v485 = vunpack.c.l.b16 %v448
    %v486 = vunpack.c.l.b16 %v449
    %v487 = vunpack.c.l.b16 %v450
    %v488 = vunpack.c.l.b16 %v451
    %v489 = vunpack.c.l.b16 %v452
    %v490 = vunpack.c.l.b16 %v453
    %v491 = vunpack.c.l.b16 %v454
    %v492 = vunpack.c.l.b16 %v455
    %v493 = vunpack.c.l.b16 %v456
    %v494 = vunpack.c.l.b16 %v457
    %v495 = vpack.c.b16 %v480, %v479
    %v496 = vpack.c.b16 %v482, %v481
    %v497 = vpack.c.b16 %v484, %v483
    %v498 = vpack.c.b16 %v486, %v485
    %v499 = vpack.c.b16 %v488, %v487
    %v500 = vpack.c.b16 %v490, %v489
    %v501 = vpack.c.b16 %v492, %v491
    %v502 = vpack.c.b16 %v494, %v493
    %511 = vmatpush.bf16.msra.mxu0 %v502
    %512 = vmatpush.bf16.msra.mxu0 %v501
    %513 = vmatpush.bf16.msra.mxu0 %v500
    %514 = vmatpush.bf16.msra.mxu0 %v499
    %515 = vmatpush.bf16.msra.mxu0 %v498
    %516 = vmatpush.bf16.msra.mxu0 %v497
    %517 = vmatpush.bf16.msra.mxu0 %v496
    %518 = vmatpush.bf16.msra.mxu0 %v495
    %519 = vmatmul.bf16.gmra.mxu0 %v440
    %v520 = vpop.f32.mrf.mxu0
    %v521 = vadd.f32 %v461, %v520
    %v522 = vpop.f32.mrf.mxu0
    %523 = vdwg.mxu0
    %v524 = vmax.f32 %v521, 0.0
    %v525 = vadd.f32 %v524, %v439
    %v526 = vpack.c.bf16 %v525, %v525
    %s527 = scalar_lea.vmem [#allocation7], 256
    %v528 = vld [vmem:[%s527] sm:$0xf]
    %v529 = vld [vmem:[%s527 + $0x4] sm:$0xf]
    %v530 = vld [vmem:[%s527 + $0x8] sm:$0xf]
    %v531 = vld [vmem:[%s527 + $0xc] sm:$0xf]
    %v532 = vld [vmem:[%s527 + $0x10] sm:$0xf]
    %v533 = vld [vmem:[%s527 + $0x14] sm:$0xf]
    %v534 = vld [vmem:[%s527 + $0x18] sm:$0xf]
    %v535 = vld [vmem:[%s527 + $0x1c] sm:$0xf]
    %v536 = vld [vmem:[%s527 + $0x20] sm:$0xf]
    %v537 = vld [vmem:[%s527 + $0x24] sm:$0xf]
    %v538 = vld [vmem:[%s527 + $0x28] sm:$0xf]
    %v539 = vld [vmem:[%s527 + $0x2c] sm:$0xf]
    %v540 = vld [vmem:[%s527 + $0x30] sm:$0xf]
    %v541 = vld [vmem:[%s527 + $0x34] sm:$0xf]
    %v542 = vld [vmem:[%s527 + $0x38] sm:$0xf]
    %v543 = vld [vmem:[%s527 + $0x3c] sm:$0xf]
    %s544 = scalar_lea.vmem [#allocation8], 4
    %v545 = vld [vmem:[%s544] sm:$0x1]
    %v547 = vperm.slane %v545, 0
    %v565 = vunpack.c.l.b16 %v528
    %v566 = vunpack.c.l.b16 %v529
    %v567 = vunpack.c.l.b16 %v530
    %v568 = vunpack.c.l.b16 %v531
    %v569 = vunpack.c.l.b16 %v532
    %v570 = vunpack.c.l.b16 %v533
    %v571 = vunpack.c.l.b16 %v534
    %v572 = vunpack.c.l.b16 %v535
    %v573 = vunpack.c.l.b16 %v536
    %v574 = vunpack.c.l.b16 %v537
    %v575 = vunpack.c.l.b16 %v538
    %v576 = vunpack.c.l.b16 %v539
    %v577 = vunpack.c.l.b16 %v540
    %v578 = vunpack.c.l.b16 %v541
    %v579 = vunpack.c.l.b16 %v542
    %v580 = vunpack.c.l.b16 %v543
    %v581 = vpack.c.b16 %v566, %v565
    %v582 = vpack.c.b16 %v568, %v567
    %v583 = vpack.c.b16 %v570, %v569
    %v584 = vpack.c.b16 %v572, %v571
    %v585 = vpack.c.b16 %v574, %v573
    %v586 = vpack.c.b16 %v576, %v575
    %v587 = vpack.c.b16 %v578, %v577
    %v588 = vpack.c.b16 %v580, %v579
    %597 = vmatpush.bf16.msra.mxu0 %v588
    %598 = vmatpush.bf16.msra.mxu0 %v587
    %599 = vmatpush.bf16.msra.mxu0 %v586
    %600 = vmatpush.bf16.msra.mxu0 %v585
    %601 = vmatpush.bf16.msra.mxu0 %v584
    %602 = vmatpush.bf16.msra.mxu0 %v583
    %603 = vmatpush.bf16.msra.mxu0 %v582
    %604 = vmatpush.bf16.msra.mxu0 %v581
    %605 = vmatmul.bf16.gmra.mxu0 %v526
    %v606 = vpop.f32.mrf.mxu0
    %v607 = vadd.f32 %v547, %v606
    %v608 = vpop.f32.mrf.mxu0
    %609 = vdwg.mxu0
    %v610 = vmax.f32 %v607, 0.0
    %v611 = vpack.c.bf16 %v610, %v610
    %s612 = scalar_lea.vmem [#allocation7], 320
    %v613 = vld [vmem:[%s612] sm:$0xf]
    %v614 = vld [vmem:[%s612 + $0x4] sm:$0xf]
    %v615 = vld [vmem:[%s612 + $0x8] sm:$0xf]
    %v616 = vld [vmem:[%s612 + $0xc] sm:$0xf]
    %v617 = vld [vmem:[%s612 + $0x10] sm:$0xf]
    %v618 = vld [vmem:[%s612 + $0x14] sm:$0xf]
    %v619 = vld [vmem:[%s612 + $0x18] sm:$0xf]
    %v620 = vld [vmem:[%s612 + $0x1c] sm:$0xf]
    %v621 = vld [vmem:[%s612 + $0x20] sm:$0xf]
    %v622 = vld [vmem:[%s612 + $0x24] sm:$0xf]
    %v623 = vld [vmem:[%s612 + $0x28] sm:$0xf]
    %v624 = vld [vmem:[%s612 + $0x2c] sm:$0xf]
    %v625 = vld [vmem:[%s612 + $0x30] sm:$0xf]
    %v626 = vld [vmem:[%s612 + $0x34] sm:$0xf]
    %v627 = vld [vmem:[%s612 + $0x38] sm:$0xf]
    %v628 = vld [vmem:[%s612 + $0x3c] sm:$0xf]
    %s629 = scalar_lea.vmem [#allocation8], 5
    %v630 = vld [vmem:[%s629] sm:$0x1]
    %v632 = vperm.slane %v630, 0
    %v650 = vunpack.c.l.b16 %v613
    %v651 = vunpack.c.l.b16 %v614
    %v652 = vunpack.c.l.b16 %v615
    %v653 = vunpack.c.l.b16 %v616
    %v654 = vunpack.c.l.b16 %v617
    %v655 = vunpack.c.l.b16 %v618
    %v656 = vunpack.c.l.b16 %v619
    %v657 = vunpack.c.l.b16 %v620
    %v658 = vunpack.c.l.b16 %v621
    %v659 = vunpack.c.l.b16 %v622
    %v660 = vunpack.c.l.b16 %v623
    %v661 = vunpack.c.l.b16 %v624
    %v662 = vunpack.c.l.b16 %v625
    %v663 = vunpack.c.l.b16 %v626
    %v664 = vunpack.c.l.b16 %v627
    %v665 = vunpack.c.l.b16 %v628
    %v666 = vpack.c.b16 %v651, %v650
    %v667 = vpack.c.b16 %v653, %v652
    %v668 = vpack.c.b16 %v655, %v654
    %v669 = vpack.c.b16 %v657, %v656
    %v670 = vpack.c.b16 %v659, %v658
    %v671 = vpack.c.b16 %v661, %v660
    %v672 = vpack.c.b16 %v663, %v662
    %v673 = vpack.c.b16 %v665, %v664
    %682 = vmatpush.bf16.msra.mxu0 %v673
    %683 = vmatpush.bf16.msra.mxu0 %v672
    %684 = vmatpush.bf16.msra.mxu0 %v671
    %685 = vmatpush.bf16.msra.mxu0 %v670
    %686 = vmatpush.bf16.msra.mxu0 %v669
    %687 = vmatpush.bf16.msra.mxu0 %v668
    %688 = vmatpush.bf16.msra.mxu0 %v667
    %689 = vmatpush.bf16.msra.mxu0 %v666
    %690 = vmatmul.bf16.gmra.mxu0 %v611
    %v691 = vpop.f32.mrf.mxu0
    %v692 = vadd.f32 %v632, %v691
    %v693 = vpop.f32.mrf.mxu0
    %694 = vdwg.mxu0
    %v695 = vmax.f32 %v692, 0.0
    %v696 = vadd.f32 %v695, %v610
    %v697 = vpack.c.bf16 %v696, %v696
    %s698 = scalar_lea.vmem [#allocation7], 384
    %v699 = vld [vmem:[%s698] sm:$0xf]
    %v700 = vld [vmem:[%s698 + $0x4] sm:$0xf]
    %v701 = vld [vmem:[%s698 + $0x8] sm:$0xf]
    %v702 = vld [vmem:[%s698 + $0xc] sm:$0xf]
    %v703 = vld [vmem:[%s698 + $0x10] sm:$0xf]
    %v704 = vld [vmem:[%s698 + $0x14] sm:$0xf]
    %v705 = vld [vmem:[%s698 + $0x18] sm:$0xf]
    %v706 = vld [vmem:[%s698 + $0x1c] sm:$0xf]
    %v707 = vld [vmem:[%s698 + $0x20] sm:$0xf]
    %v708 = vld [vmem:[%s698 + $0x24] sm:$0xf]
    %v709 = vld [vmem:[%s698 + $0x28] sm:$0xf]
    %v710 = vld [vmem:[%s698 + $0x2c] sm:$0xf]
    %v711 = vld [vmem:[%s698 + $0x30] sm:$0xf]
    %v712 = vld [vmem:[%s698 + $0x34] sm:$0xf]
    %v713 = vld [vmem:[%s698 + $0x38] sm:$0xf]
    %v714 = vld [vmem:[%s698 + $0x3c] sm:$0xf]
    %s715 = scalar_lea.vmem [#allocation8], 6
    %v716 = vld [vmem:[%s715] sm:$0x1]
    %v718 = vperm.slane %v716, 0
    %v736 = vunpack.c.l.b16 %v699
    %v737 = vunpack.c.l.b16 %v700
    %v738 = vunpack.c.l.b16 %v701
    %v739 = vunpack.c.l.b16 %v702
    %v740 = vunpack.c.l.b16 %v703
    %v741 = vunpack.c.l.b16 %v704
    %v742 = vunpack.c.l.b16 %v705
    %v743 = vunpack.c.l.b16 %v706
    %v744 = vunpack.c.l.b16 %v707
    %v745 = vunpack.c.l.b16 %v708
    %v746 = vunpack.c.l.b16 %v709
    %v747 = vunpack.c.l.b16 %v710
    %v748 = vunpack.c.l.b16 %v711
    %v749 = vunpack.c.l.b16 %v712
    %v750 = vunpack.c.l.b16 %v713
    %v751 = vunpack.c.l.b16 %v714
    %v752 = vpack.c.b16 %v737, %v736
    %v753 = vpack.c.b16 %v739, %v738
    %v754 = vpack.c.b16 %v741, %v740
    %v755 = vpack.c.b16 %v743, %v742
    %v756 = vpack.c.b16 %v745, %v744
    %v757 = vpack.c.b16 %v747, %v746
    %v758 = vpack.c.b16 %v749, %v748
    %v759 = vpack.c.b16 %v751, %v750
    %768 = vmatpush.bf16.msra.mxu0 %v759
    %769 = vmatpush.bf16.msra.mxu0 %v758
    %770 = vmatpush.bf16.msra.mxu0 %v757
    %771 = vmatpush.bf16.msra.mxu0 %v756
    %772 = vmatpush.bf16.msra.mxu0 %v755
    %773 = vmatpush.bf16.msra.mxu0 %v754
    %774 = vmatpush.bf16.msra.mxu0 %v753
    %775 = vmatpush.bf16.msra.mxu0 %v752
    %776 = vmatmul.bf16.gmra.mxu0 %v697
    %v777 = vpop.f32.mrf.mxu0
    %v778 = vadd.f32 %v718, %v777
    %v779 = vpop.f32.mrf.mxu0
    %780 = vdwg.mxu0
    %v781 = vmax.f32 %v778, 0.0
    %v782 = vpack.c.bf16 %v781, %v781
    %s783 = scalar_lea.vmem [#allocation7], 448
    %v784 = vld [vmem:[%s783] sm:$0xf]
    %v785 = vld [vmem:[%s783 + $0x4] sm:$0xf]
    %v786 = vld [vmem:[%s783 + $0x8] sm:$0xf]
    %v787 = vld [vmem:[%s783 + $0xc] sm:$0xf]
    %v788 = vld [vmem:[%s783 + $0x10] sm:$0xf]
    %v789 = vld [vmem:[%s783 + $0x14] sm:$0xf]
    %v790 = vld [vmem:[%s783 + $0x18] sm:$0xf]
    %v791 = vld [vmem:[%s783 + $0x1c] sm:$0xf]
    %v792 = vld [vmem:[%s783 + $0x20] sm:$0xf]
    %v793 = vld [vmem:[%s783 + $0x24] sm:$0xf]
    %v794 = vld [vmem:[%s783 + $0x28] sm:$0xf]
    %v795 = vld [vmem:[%s783 + $0x2c] sm:$0xf]
    %v796 = vld [vmem:[%s783 + $0x30] sm:$0xf]
    %v797 = vld [vmem:[%s783 + $0x34] sm:$0xf]
    %v798 = vld [vmem:[%s783 + $0x38] sm:$0xf]
    %v799 = vld [vmem:[%s783 + $0x3c] sm:$0xf]
    %s800 = scalar_lea.vmem [#allocation8], 7
    %v801 = vld [vmem:[%s800] sm:$0x1]
    %v803 = vperm.slane %v801, 0
    %v821 = vunpack.c.l.b16 %v784
    %v822 = vunpack.c.l.b16 %v785
    %v823 = vunpack.c.l.b16 %v786
    %v824 = vunpack.c.l.b16 %v787
    %v825 = vunpack.c.l.b16 %v788
    %v826 = vunpack.c.l.b16 %v789
    %v827 = vunpack.c.l.b16 %v790
    %v828 = vunpack.c.l.b16 %v791
    %v829 = vunpack.c.l.b16 %v792
    %v830 = vunpack.c.l.b16 %v793
    %v831 = vunpack.c.l.b16 %v794
    %v832 = vunpack.c.l.b16 %v795
    %v833 = vunpack.c.l.b16 %v796
    %v834 = vunpack.c.l.b16 %v797
    %v835 = vunpack.c.l.b16 %v798
    %v836 = vunpack.c.l.b16 %v799
    %v837 = vpack.c.b16 %v822, %v821
    %v838 = vpack.c.b16 %v824, %v823
    %v839 = vpack.c.b16 %v826, %v825
    %v840 = vpack.c.b16 %v828, %v827
    %v841 = vpack.c.b16 %v830, %v829
    %v842 = vpack.c.b16 %v832, %v831
    %v843 = vpack.c.b16 %v834, %v833
    %v844 = vpack.c.b16 %v836, %v835
    %853 = vmatpush.bf16.msra.mxu0 %v844
    %854 = vmatpush.bf16.msra.mxu0 %v843
    %855 = vmatpush.bf16.msra.mxu0 %v842
    %856 = vmatpush.bf16.msra.mxu0 %v841
    %857 = vmatpush.bf16.msra.mxu0 %v840
    %858 = vmatpush.bf16.msra.mxu0 %v839
    %859 = vmatpush.bf16.msra.mxu0 %v838
    %860 = vmatpush.bf16.msra.mxu0 %v837
    %861 = vmatmul.bf16.gmra.mxu0 %v782
    %v862 = vpop.f32.mrf.mxu0
    %v863 = vadd.f32 %v803, %v862
    %v864 = vpop.f32.mrf.mxu0
    %865 = vdwg.mxu0
    %v866 = vmax.f32 %v863, 0.0
    %v867 = vpack.c.bf16 %v866, %v866
    %v868 = vld [vmem:[#allocation10] sm:$0xf]
    %v869 = vld [vmem:[#allocation10 + $0x4] sm:$0xf]
    %v870 = vld [vmem:[#allocation10 + $0x8] sm:$0xf]
    %v871 = vld [vmem:[#allocation10 + $0xc] sm:$0xf]
    %v872 = vld [vmem:[#allocation10 + $0x10] sm:$0xf]
    %v873 = vld [vmem:[#allocation10 + $0x14] sm:$0xf]
    %v874 = vld [vmem:[#allocation10 + $0x18] sm:$0xf]
    %v875 = vld [vmem:[#allocation10 + $0x1c] sm:$0xf]
    %v876 = vld [vmem:[#allocation10 + $0x20] sm:$0xf]
    %v877 = vld [vmem:[#allocation10 + $0x24] sm:$0xf]
    %v878 = vld [vmem:[#allocation10 + $0x28] sm:$0xf]
    %v879 = vld [vmem:[#allocation10 + $0x2c] sm:$0xf]
    %v880 = vld [vmem:[#allocation10 + $0x30] sm:$0xf]
    %v881 = vld [vmem:[#allocation10 + $0x34] sm:$0xf]
    %v882 = vld [vmem:[#allocation10 + $0x38] sm:$0xf]
    %v883 = vld [vmem:[#allocation10 + $0x3c] sm:$0xf]
    %v884 = vld [vmem:[%s6] sm:$0x1]
    %v886 = vperm.slane %v884, 0
    %v904 = vunpack.c.l.b16 %v868
    %v905 = vunpack.c.l.b16 %v869
    %v906 = vunpack.c.l.b16 %v870
    %v907 = vunpack.c.l.b16 %v871
    %v908 = vunpack.c.l.b16 %v872
    %v909 = vunpack.c.l.b16 %v873
    %v910 = vunpack.c.l.b16 %v874
    %v911 = vunpack.c.l.b16 %v875
    %v912 = vunpack.c.l.b16 %v876
    %v913 = vunpack.c.l.b16 %v877
    %v914 = vunpack.c.l.b16 %v878
    %v915 = vunpack.c.l.b16 %v879
    %v916 = vunpack.c.l.b16 %v880
    %v917 = vunpack.c.l.b16 %v881
    %v918 = vunpack.c.l.b16 %v882
    %v919 = vunpack.c.l.b16 %v883
    %v920 = vpack.c.b16 %v905, %v904
    %v921 = vpack.c.b16 %v907, %v906
    %v922 = vpack.c.b16 %v909, %v908
    %v923 = vpack.c.b16 %v911, %v910
    %v924 = vpack.c.b16 %v913, %v912
    %v925 = vpack.c.b16 %v915, %v914
    %v926 = vpack.c.b16 %v917, %v916
    %v927 = vpack.c.b16 %v919, %v918
    %936 = vmatpush.bf16.msra.mxu0 %v927
    %937 = vmatpush.bf16.msra.mxu0 %v926
    %938 = vmatpush.bf16.msra.mxu0 %v925
    %939 = vmatpush.bf16.msra.mxu0 %v924
    %940 = vmatpush.bf16.msra.mxu0 %v923
    %941 = vmatpush.bf16.msra.mxu0 %v922
    %942 = vmatpush.bf16.msra.mxu0 %v921
    %943 = vmatpush.bf16.msra.mxu0 %v920
    %944 = vmatmul.bf16.gmra.mxu0 %v867
    %v945 = vpop.f32.mrf.mxu0
    %v946 = vadd.f32 %v886, %v945
    %v947 = vpop.f32.mrf.mxu0
    %948 = vdwg.mxu0
    %949 = vst [vmem:[#allocation11] sm:$0xff] %v946
    // Predicated region
    $region50: #{tpu_custom_call.1} parent=1 // pred_check
      _
    $region51: #{tpu_custom_call.1} parent=1 // pred_check_branch
      %951 = sbr.rel (0) target = $region53
    $region52: #{tpu_custom_call.1} parent=1 // pred_region
      %953 = vsyncadd [#allocation4], 0
      %s955 = sshll.u32 [#allocation11], 4
      %s956 = int_to_ptr.vmem [resolvable:$true] %s955
      %s957 = sshll.u32 %s7, 4
      %s958 = int_to_ptr.hbm [resolvable:$true] %s957
      %960 = dma.vmem_to_hbm [thread:$0]  %s956, 128, %s958, [#allocation4]
    $region53: #{tpu_custom_call.1} parent=1 // pred_fallthru
      _
    // Predicated region
    $region54: #{tpu_custom_call.1} parent=1 // pred_check
      _
    $region55: #{tpu_custom_call.1} parent=1 // pred_check_branch
      %962 = sbr.rel (0) target = $region57
    $region56: #{tpu_custom_call.1} parent=1 // pred_region
      %964 = dma.done [#allocation4], 128
    $region57: #{tpu_custom_call.1} parent=1 // pred_fallthru
      _
    %965 = vsyncpa [#allocation3], 1
    %966 = vsyncpa [#allocation6], 1
    %967 = vsyncpa [#allocation9], 1
    %968 = vsyncpa [#allocation4], 1

// kernel: tpu_custom_call.1
$region0: #{tpu_custom_call.1}
  #allocation0 [shape = 'u32[]', space=smem, size = 0x4, offset = 0x4, fixed_abs, tag = 'smem constant byte address 0x4 - core index']
  #allocation1 [shape = 'u32[72,128]{1,0:T(1,128)}', space=vmem, size = 0x9000, scoped, tag = 'internal scratch']
  %s0 = inlined_call_operand.hbm [shape: bf16[8,128], index: 0, kind: input, shape index: {}]
  %s1 = inlined_call_operand.hbm [shape: bf16[128,128], index: 1, kind: input, shape index: {}]
  %s2 = inlined_call_operand.vmem [shape: f32[1,128], index: 2, kind: input, shape index: {}]
  %s3 = inlined_call_operand.hbm [shape: bf16[8,128,128], index: 3, kind: input, shape index: {}]
  %s4 = inlined_call_operand.hbm [shape: f32[8,1,128], index: 4, kind: input, shape index: {}]
  %s5 = inlined_call_operand.hbm [shape: bf16[128,128], index: 5, kind: input, shape index: {}]
  %s6 = inlined_call_operand.vmem [shape: f32[1,128], index: 6, kind: input, shape index: {}]
  %s7 = inlined_call_operand.hbm [shape: f32[8,128], index: 7, kind: output, shape index: {}]
  %s8 = sld [smem:[#allocation0]]
  $region58: #{tpu_custom_call.1} parent=0
    _
  %s10 = ssub.s32 1, %s8
  %s11 = scalar_select 0, %s10, %s8
  $region1: #{tpu_custom_call.1} parent=0
    #allocation2 [shape = 'u8[2048]{0}', space=vmem, size = 0x800, scoped, tag = 'input window, operand 0, single buffered']
    #allocation3 [shape = 's32[1]{0}', space=sflag, size = 0x4, scoped, tag = 'scoped memory for tpu_custom_call.1']
    #allocation4 [shape = 's32[1]{0}', space=sflag, size = 0x4, scoped, tag = 'scoped memory for tpu_custom_call.1']
    #allocation5 [shape = 'u8[32768]{0}', space=vmem, size = 0x8000, scoped, tag = 'input window, operand 1, single buffered']
    #allocation6 [shape = 's32[1]{0}', space=sflag, size = 0x4, scoped, tag = 'scoped memory for tpu_custom_call.1']
    #allocation7 [shape = 'u8[262144]{0}', space=vmem, size = 0x40000, scoped, tag = 'input window, operand 3, single buffered']
    #allocation8 [shape = 'u8[4096]{0}', space=vmem, size = 0x1000, scoped, tag = 'input window, operand 4, single buffered']
    #allocation9 [shape = 's32[1]{0}', space=sflag, size = 0x4, scoped, tag = 'scoped memory for tpu_custom_call.1']
    #allocation10 [shape = 'u8[32768]{0}', space=vmem, size = 0x8000, scoped, tag = 'input window, operand 5, single buffered']
    #allocation11 [shape = 'u8[4096]{0}', space=vmem, size = 0x1000, scoped, tag = 'output window, operand 0, single buffered']
    %12 = vsyncpa [#allocation3], 0
    %13 = vsyncpa [#allocation6], 0
    %14 = vsyncpa [#allocation9], 0
    %15 = vsyncpa [#allocation4], 0
    // Predicated region
    $region2: #{tpu_custom_call.1} parent=1 // pred_check
      _
    $region3: #{tpu_custom_call.1} parent=1 // pred_check_branch
      %17 = sbr.rel (0) target = $region5
    $region4: #{tpu_custom_call.1} parent=1 // pred_region
      %19 = vsyncadd [#allocation3], 0
      %s21 = sshll.u32 %s0, 4
      %s22 = int_to_ptr.hbm [resolvable:$true] %s21
      %s23 = sshll.u32 [#allocation2], 4
      %s24 = int_to_ptr.vmem [resolvable:$true] %s23
      %26 = dma.hbm_to_vmem [thread:$0]  %s22, 64, %s24, [#allocation3]
    $region5: #{tpu_custom_call.1} parent=1 // pred_fallthru
      _
    // Predicated region
    $region6: #{tpu_custom_call.1} parent=1 // pred_check
      _
    $region7: #{tpu_custom_call.1} parent=1 // pred_check_branch
      %28 = sbr.rel (0) target = $region9
    $region8: #{tpu_custom_call.1} parent=1 // pred_region
      %30 = vsyncadd [#allocation6], 0
      %s31 = sshll.u32 %s1, 4
      %s32 = int_to_ptr.hbm [resolvable:$true] %s31
      %s33 = sshll.u32 [#allocation5], 4
      %s34 = int_to_ptr.vmem [resolvable:$true] %s33
      %39 = dma.hbm_to_vmem [thread:$0]  %s32, 1024, %s34, [#allocation6], 64, 64, 4
    $region9: #{tpu_custom_call.1} parent=1 // pred_fallthru
      _
    // Predicated region
    $region10: #{tpu_custom_call.1} parent=1 // pred_check
      _
    $region11: #{tpu_custom_call.1} parent=1 // pred_check_branch
      %41 = sbr.rel (0) target = $region13
    $region12: #{tpu_custom_call.1} parent=1 // pred_region
      _
    $region13: #{tpu_custom_call.1} parent=1 // pred_fallthru
      _
    // Predicated region
    $region14: #{tpu_custom_call.1} parent=1 // pred_check
      _
    $region15: #{tpu_custom_call.1} parent=1 // pred_check_branch
      %43 = sbr.rel (0) target = $region17
    $region16: #{tpu_custom_call.1} parent=1 // pred_region
      %45 = vsyncadd [#allocation6], 0
      %s46 = sshll.u32 %s3, 4
      %s47 = int_to_ptr.hbm [resolvable:$true] %s46
      %s48 = sshll.u32 [#allocation7], 4
      %s49 = int_to_ptr.vmem [resolvable:$true] %s48
      %54 = dma.hbm_to_vmem [thread:$0]  %s47, 8192, %s49, [#allocation6], 64, 64, 4
    $region17: #{tpu_custom_call.1} parent=1 // pred_fallthru
      _
    // Predicated region
    $region18: #{tpu_custom_call.1} parent=1 // pred_check
      _
    $region19: #{tpu_custom_call.1} parent=1 // pred_check_branch
      %56 = sbr.rel (0) target = $region21
    $region20: #{tpu_custom_call.1} parent=1 // pred_region
      %58 = vsyncadd [#allocation9], 0
      %s59 = sshll.u32 %s4, 4
      %s60 = int_to_ptr.hbm [resolvable:$true] %s59
      %s61 = sshll.u32 [#allocation8], 4
      %s62 = int_to_ptr.vmem [resolvable:$true] %s61
      %67 = dma.hbm_to_vmem [thread:$0]  %s60, 128, %s62, [#allocation9], 16, 16, 1
    $region21: #{tpu_custom_call.1} parent=1 // pred_fallthru
      _
    // Predicated region
    $region22: #{tpu_custom_call.1} parent=1 // pred_check
      _
    $region23: #{tpu_custom_call.1} parent=1 // pred_check_branch
      %69 = sbr.rel (0) target = $region25
    $region24: #{tpu_custom_call.1} parent=1 // pred_region
      %71 = vsyncadd [#allocation9], 0
      %s72 = sshll.u32 %s5, 4
      %s73 = int_to_ptr.hbm [resolvable:$true] %s72
      %s74 = sshll.u32 [#allocation10], 4
      %s75 = int_to_ptr.vmem [resolvable:$true] %s74
      %80 = dma.hbm_to_vmem [thread:$0]  %s73, 1024, %s75, [#allocation9], 64, 64, 4
    $region25: #{tpu_custom_call.1} parent=1 // pred_fallthru
      _
    // Predicated region
    $region26: #{tpu_custom_call.1} parent=1 // pred_check
      _
    $region27: #{tpu_custom_call.1} parent=1 // pred_check_branch
      %82 = sbr.rel (0) target = $region29
    $region28: #{tpu_custom_call.1} parent=1 // pred_region
      _
    $region29: #{tpu_custom_call.1} parent=1 // pred_fallthru
      _
    // Predicated region
    $region30: #{tpu_custom_call.1} parent=1 // pred_check
      _
    $region31: #{tpu_custom_call.1} parent=1 // pred_check_branch
      %84 = sbr.rel (0) target = $region33
    $region32: #{tpu_custom_call.1} parent=1 // pred_region
      %86 = dma.done [#allocation3], 64
    $region33: #{tpu_custom_call.1} parent=1 // pred_fallthru
      _
    // Predicated region
    $region34: #{tpu_custom_call.1} parent=1 // pred_check
      _
    $region35: #{tpu_custom_call.1} parent=1 // pred_check_branch
      %88 = sbr.rel (0) target = $region37
    $region36: #{tpu_custom_call.1} parent=1 // pred_region
      %90 = dma.done [#allocation6], 1024
    $region37: #{tpu_custom_call.1} parent=1 // pred_fallthru
      _
    // Predicated region
    $region38: #{tpu_custom_call.1} parent=1 // pred_check
      _
    $region39: #{tpu_custom_call.1} parent=1 // pred_check_branch
      %92 = sbr.rel (0) target = $region41
    $region40: #{tpu_custom_call.1} parent=1 // pred_region
      %94 = dma.done [#allocation6], 8192
    $region41: #{tpu_custom_call.1} parent=1 // pred_fallthru
      _
    // Predicated region
    $region42: #{tpu_custom_call.1} parent=1 // pred_check
      _
    $region43: #{tpu_custom_call.1} parent=1 // pred_check_branch
      %96 = sbr.rel (0) target = $region45
    $region44: #{tpu_custom_call.1} parent=1 // pred_region
      %98 = dma.done [#allocation9], 128
    $region45: #{tpu_custom_call.1} parent=1 // pred_fallthru
      _
    // Predicated region
    $region46: #{tpu_custom_call.1} parent=1 // pred_check
      _
    $region47: #{tpu_custom_call.1} parent=1 // pred_check_branch
      %100 = sbr.rel (0) target = $region49
    $region48: #{tpu_custom_call.1} parent=1 // pred_region
      %102 = dma.done [#allocation9], 1024
    $region49: #{tpu_custom_call.1} parent=1 // pred_fallthru
      _
    %v103 = vld [vmem:[#allocation2] sm:$0xf]
    %v104 = vld [vmem:[#allocation5] sm:$0xf]
    %v105 = vld [vmem:[#allocation5 + $0x4] sm:$0xf]
    %v106 = vld [vmem:[#allocation5 + $0x8] sm:$0xf]
    %v107 = vld [vmem:[#allocation5 + $0xc] sm:$0xf]
    %v108 = vld [vmem:[#allocation5 + $0x10] sm:$0xf]
    %v109 = vld [vmem:[#allocation5 + $0x14] sm:$0xf]
    %v110 = vld [vmem:[#allocation5 + $0x18] sm:$0xf]
    %v111 = vld [vmem:[#allocation5 + $0x1c] sm:$0xf]
    %v112 = vld [vmem:[#allocation5 + $0x20] sm:$0xf]
    %v113 = vld [vmem:[#allocation5 + $0x24] sm:$0xf]
    %v114 = vld [vmem:[#allocation5 + $0x28] sm:$0xf]
    %v115 = vld [vmem:[#allocation5 + $0x2c] sm:$0xf]
    %v116 = vld [vmem:[#allocation5 + $0x30] sm:$0xf]
    %v117 = vld [vmem:[#allocation5 + $0x34] sm:$0xf]
    %v118 = vld [vmem:[#allocation5 + $0x38] sm:$0xf]
    %v119 = vld [vmem:[#allocation5 + $0x3c] sm:$0xf]
    %v120 = vld [vmem:[%s2] sm:$0x1]
    %v122 = vperm.slane %v120, 0
    %v140 = vunpack.c.l.b16 %v104
    %v141 = vunpack.c.l.b16 %v105
    %v142 = vunpack.c.l.b16 %v106
    %v143 = vunpack.c.l.b16 %v107
    %v144 = vunpack.c.l.b16 %v108
    %v145 = vunpack.c.l.b16 %v109
    %v146 = vunpack.c.l.b16 %v110
    %v147 = vunpack.c.l.b16 %v111
    %v148 = vunpack.c.l.b16 %v112
    %v149 = vunpack.c.l.b16 %v113
    %v150 = vunpack.c.l.b16 %v114
    %v151 = vunpack.c.l.b16 %v115
    %v152 = vunpack.c.l.b16 %v116
    %v153 = vunpack.c.l.b16 %v117
    %v154 = vunpack.c.l.b16 %v118
    %v155 = vunpack.c.l.b16 %v119
    %v156 = vpack.c.b16 %v141, %v140
    %v157 = vpack.c.b16 %v143, %v142
    %v158 = vpack.c.b16 %v145, %v144
    %v159 = vpack.c.b16 %v147, %v146
    %v160 = vpack.c.b16 %v149, %v148
    %v161 = vpack.c.b16 %v151, %v150
    %v162 = vpack.c.b16 %v153, %v152
    %v163 = vpack.c.b16 %v155, %v154
    %172 = vmatpush.bf16.msra.mxu0 %v163
    %173 = vmatpush.bf16.msra.mxu0 %v162
    %174 = vmatpush.bf16.msra.mxu0 %v161
    %175 = vmatpush.bf16.msra.mxu0 %v160
    %176 = vmatpush.bf16.msra.mxu0 %v159
    %177 = vmatpush.bf16.msra.mxu0 %v158
    %178 = vmatpush.bf16.msra.mxu0 %v157
    %179 = vmatpush.bf16.msra.mxu0 %v156
    %180 = vmatmul.bf16.gmra.mxu0 %v103
    %v181 = vpop.f32.mrf.mxu0
    %v182 = vadd.f32 %v122, %v181
    %v183 = vpop.f32.mrf.mxu0
    %184 = vdwg.mxu0
    %v185 = vmax.f32 %v182, 0.0
    %v186 = vpack.c.bf16 %v185, %v185
    %v187 = vld [vmem:[#allocation7] sm:$0xf]
    %v188 = vld [vmem:[#allocation7 + $0x4] sm:$0xf]
    %v189 = vld [vmem:[#allocation7 + $0x8] sm:$0xf]
    %v190 = vld [vmem:[#allocation7 + $0xc] sm:$0xf]
    %v191 = vld [vmem:[#allocation7 + $0x10] sm:$0xf]
    %v192 = vld [vmem:[#allocation7 + $0x14] sm:$0xf]
    %v193 = vld [vmem:[#allocation7 + $0x18] sm:$0xf]
    %v194 = vld [vmem:[#allocation7 + $0x1c] sm:$0xf]
    %v195 = vld [vmem:[#allocation7 + $0x20] sm:$0xf]
    %v196 = vld [vmem:[#allocation7 + $0x24] sm:$0xf]
    %v197 = vld [vmem:[#allocation7 + $0x28] sm:$0xf]
    %v198 = vld [vmem:[#allocation7 + $0x2c] sm:$0xf]
    %v199 = vld [vmem:[#allocation7 + $0x30] sm:$0xf]
    %v200 = vld [vmem:[#allocation7 + $0x34] sm:$0xf]
    %v201 = vld [vmem:[#allocation7 + $0x38] sm:$0xf]
    %v202 = vld [vmem:[#allocation7 + $0x3c] sm:$0xf]
    %v203 = vld [vmem:[#allocation8] sm:$0x1]
    %v205 = vperm.slane %v203, 0
    %v223 = vunpack.c.l.b16 %v187
    %v224 = vunpack.c.l.b16 %v188
    %v225 = vunpack.c.l.b16 %v189
    %v226 = vunpack.c.l.b16 %v190
    %v227 = vunpack.c.l.b16 %v191
    %v228 = vunpack.c.l.b16 %v192
    %v229 = vunpack.c.l.b16 %v193
    %v230 = vunpack.c.l.b16 %v194
    %v231 = vunpack.c.l.b16 %v195
    %v232 = vunpack.c.l.b16 %v196
    %v233 = vunpack.c.l.b16 %v197
    %v234 = vunpack.c.l.b16 %v198
    %v235 = vunpack.c.l.b16 %v199
    %v236 = vunpack.c.l.b16 %v200
    %v237 = vunpack.c.l.b16 %v201
    %v238 = vunpack.c.l.b16 %v202
    %v239 = vpack.c.b16 %v224, %v223
    %v240 = vpack.c.b16 %v226, %v225
    %v241 = vpack.c.b16 %v228, %v227
    %v242 = vpack.c.b16 %v230, %v229
    %v243 = vpack.c.b16 %v232, %v231
    %v244 = vpack.c.b16 %v234, %v233
    %v245 = vpack.c.b16 %v236, %v235
    %v246 = vpack.c.b16 %v238, %v237
    %255 = vmatpush.bf16.msra.mxu0 %v246
    %256 = vmatpush.bf16.msra.mxu0 %v245
    %257 = vmatpush.bf16.msra.mxu0 %v244
    %258 = vmatpush.bf16.msra.mxu0 %v243
    %259 = vmatpush.bf16.msra.mxu0 %v242
    %260 = vmatpush.bf16.msra.mxu0 %v241
    %261 = vmatpush.bf16.msra.mxu0 %v240
    %262 = vmatpush.bf16.msra.mxu0 %v239
    %263 = vmatmul.bf16.gmra.mxu0 %v186
    %v264 = vpop.f32.mrf.mxu0
    %v265 = vadd.f32 %v205, %v264
    %v266 = vpop.f32.mrf.mxu0
    %267 = vdwg.mxu0
    %v268 = vmax.f32 %v265, 0.0
    %v269 = vpack.c.bf16 %v268, %v268
    %s270 = scalar_lea.vmem [#allocation7], 64
    %v271 = vld [vmem:[%s270] sm:$0xf]
    %v272 = vld [vmem:[%s270 + $0x4] sm:$0xf]
    %v273 = vld [vmem:[%s270 + $0x8] sm:$0xf]
    %v274 = vld [vmem:[%s270 + $0xc] sm:$0xf]
    %v275 = vld [vmem:[%s270 + $0x10] sm:$0xf]
    %v276 = vld [vmem:[%s270 + $0x14] sm:$0xf]
    %v277 = vld [vmem:[%s270 + $0x18] sm:$0xf]
    %v278 = vld [vmem:[%s270 + $0x1c] sm:$0xf]
    %v279 = vld [vmem:[%s270 + $0x20] sm:$0xf]
    %v280 = vld [vmem:[%s270 + $0x24] sm:$0xf]
    %v281 = vld [vmem:[%s270 + $0x28] sm:$0xf]
    %v282 = vld [vmem:[%s270 + $0x2c] sm:$0xf]
    %v283 = vld [vmem:[%s270 + $0x30] sm:$0xf]
    %v284 = vld [vmem:[%s270 + $0x34] sm:$0xf]
    %v285 = vld [vmem:[%s270 + $0x38] sm:$0xf]
    %v286 = vld [vmem:[%s270 + $0x3c] sm:$0xf]
    %s287 = scalar_lea.vmem [#allocation8], 1
    %v288 = vld [vmem:[%s287] sm:$0x1]
    %v290 = vperm.slane %v288, 0
    %v308 = vunpack.c.l.b16 %v271
    %v309 = vunpack.c.l.b16 %v272
    %v310 = vunpack.c.l.b16 %v273
    %v311 = vunpack.c.l.b16 %v274
    %v312 = vunpack.c.l.b16 %v275
    %v313 = vunpack.c.l.b16 %v276
    %v314 = vunpack.c.l.b16 %v277
    %v315 = vunpack.c.l.b16 %v278
    %v316 = vunpack.c.l.b16 %v279
    %v317 = vunpack.c.l.b16 %v280
    %v318 = vunpack.c.l.b16 %v281
    %v319 = vunpack.c.l.b16 %v282
    %v320 = vunpack.c.l.b16 %v283
    %v321 = vunpack.c.l.b16 %v284
    %v322 = vunpack.c.l.b16 %v285
    %v323 = vunpack.c.l.b16 %v286
    %v324 = vpack.c.b16 %v309, %v308
    %v325 = vpack.c.b16 %v311, %v310
    %v326 = vpack.c.b16 %v313, %v312
    %v327 = vpack.c.b16 %v315, %v314
    %v328 = vpack.c.b16 %v317, %v316
    %v329 = vpack.c.b16 %v319, %v318
    %v330 = vpack.c.b16 %v321, %v320
    %v331 = vpack.c.b16 %v323, %v322
    %340 = vmatpush.bf16.msra.mxu0 %v331
    %341 = vmatpush.bf16.msra.mxu0 %v330
    %342 = vmatpush.bf16.msra.mxu0 %v329
    %343 = vmatpush.bf16.msra.mxu0 %v328
    %344 = vmatpush.bf16.msra.mxu0 %v327
    %345 = vmatpush.bf16.msra.mxu0 %v326
    %346 = vmatpush.bf16.msra.mxu0 %v325
    %347 = vmatpush.bf16.msra.mxu0 %v324
    %348 = vmatmul.bf16.gmra.mxu0 %v269
    %v349 = vpop.f32.mrf.mxu0
    %v350 = vadd.f32 %v290, %v349
    %v351 = vpop.f32.mrf.mxu0
    %352 = vdwg.mxu0
    %v353 = vmax.f32 %v350, 0.0
    %v354 = vadd.f32 %v353, %v185
    %v355 = vpack.c.bf16 %v354, %v354
    %s356 = scalar_lea.vmem [#allocation7], 128
    %v357 = vld [vmem:[%s356] sm:$0xf]
    %v358 = vld [vmem:[%s356 + $0x4] sm:$0xf]
    %v359 = vld [vmem:[%s356 + $0x8] sm:$0xf]
    %v360 = vld [vmem:[%s356 + $0xc] sm:$0xf]
    %v361 = vld [vmem:[%s356 + $0x10] sm:$0xf]
    %v362 = vld [vmem:[%s356 + $0x14] sm:$0xf]
    %v363 = vld [vmem:[%s356 + $0x18] sm:$0xf]
    %v364 = vld [vmem:[%s356 + $0x1c] sm:$0xf]
    %v365 = vld [vmem:[%s356 + $0x20] sm:$0xf]
    %v366 = vld [vmem:[%s356 + $0x24] sm:$0xf]
    %v367 = vld [vmem:[%s356 + $0x28] sm:$0xf]
    %v368 = vld [vmem:[%s356 + $0x2c] sm:$0xf]
    %v369 = vld [vmem:[%s356 + $0x30] sm:$0xf]
    %v370 = vld [vmem:[%s356 + $0x34] sm:$0xf]
    %v371 = vld [vmem:[%s356 + $0x38] sm:$0xf]
    %v372 = vld [vmem:[%s356 + $0x3c] sm:$0xf]
    %s373 = scalar_lea.vmem [#allocation8], 2
    %v374 = vld [vmem:[%s373] sm:$0x1]
    %v376 = vperm.slane %v374, 0
    %v394 = vunpack.c.l.b16 %v357
    %v395 = vunpack.c.l.b16 %v358
    %v396 = vunpack.c.l.b16 %v359
    %v397 = vunpack.c.l.b16 %v360
    %v398 = vunpack.c.l.b16 %v361
    %v399 = vunpack.c.l.b16 %v362
    %v400 = vunpack.c.l.b16 %v363
    %v401 = vunpack.c.l.b16 %v364
    %v402 = vunpack.c.l.b16 %v365
    %v403 = vunpack.c.l.b16 %v366
    %v404 = vunpack.c.l.b16 %v367
    %v405 = vunpack.c.l.b16 %v368
    %v406 = vunpack.c.l.b16 %v369
    %v407 = vunpack.c.l.b16 %v370
    %v408 = vunpack.c.l.b16 %v371
    %v409 = vunpack.c.l.b16 %v372
    %v410 = vpack.c.b16 %v395, %v394
    %v411 = vpack.c.b16 %v397, %v396
    %v412 = vpack.c.b16 %v399, %v398
    %v413 = vpack.c.b16 %v401, %v400
    %v414 = vpack.c.b16 %v403, %v402
    %v415 = vpack.c.b16 %v405, %v404
    %v416 = vpack.c.b16 %v407, %v406
    %v417 = vpack.c.b16 %v409, %v408
    %426 = vmatpush.bf16.msra.mxu0 %v417
    %427 = vmatpush.bf16.msra.mxu0 %v416
    %428 = vmatpush.bf16.msra.mxu0 %v415
    %429 = vmatpush.bf16.msra.mxu0 %v414
    %430 = vmatpush.bf16.msra.mxu0 %v413
    %431 = vmatpush.bf16.msra.mxu0 %v412
    %432 = vmatpush.bf16.msra.mxu0 %v411
    %433 = vmatpush.bf16.msra.mxu0 %v410
    %434 = vmatmul.bf16.gmra.mxu0 %v355
    %v435 = vpop.f32.mrf.mxu0
    %v436 = vadd.f32 %v376, %v435
    %v437 = vpop.f32.mrf.mxu0
    %438 = vdwg.mxu0
    %v439 = vmax.f32 %v436, 0.0
    %v440 = vpack.c.bf16 %v439, %v439
    %s441 = scalar_lea.vmem [#allocation7], 192
    %v442 = vld [vmem:[%s441] sm:$0xf]
    %v443 = vld [vmem:[%s441 + $0x4] sm:$0xf]
    %v444 = vld [vmem:[%s441 + $0x8] sm:$0xf]
    %v445 = vld [vmem:[%s441 + $0xc] sm:$0xf]
    %v446 = vld [vmem:[%s441 + $0x10] sm:$0xf]
    %v447 = vld [vmem:[%s441 + $0x14] sm:$0xf]
    %v448 = vld [vmem:[%s441 + $0x18] sm:$0xf]
    %v449 = vld [vmem:[%s441 + $0x1c] sm:$0xf]
    %v450 = vld [vmem:[%s441 + $0x20] sm:$0xf]
    %v451 = vld [vmem:[%s441 + $0x24] sm:$0xf]
    %v452 = vld [vmem:[%s441 + $0x28] sm:$0xf]
    %v453 = vld [vmem:[%s441 + $0x2c] sm:$0xf]
    %v454 = vld [vmem:[%s441 + $0x30] sm:$0xf]
    %v455 = vld [vmem:[%s441 + $0x34] sm:$0xf]
    %v456 = vld [vmem:[%s441 + $0x38] sm:$0xf]
    %v457 = vld [vmem:[%s441 + $0x3c] sm:$0xf]
    %s458 = scalar_lea.vmem [#allocation8], 3
    %v459 = vld [vmem:[%s458] sm:$0x1]
    %v461 = vperm.slane %v459, 0
    %v479 = vunpack.c.l.b16 %v442
    %v480 = vunpack.c.l.b16 %v443
    %v481 = vunpack.c.l.b16 %v444
    %v482 = vunpack.c.l.b16 %v445
    %v483 = vunpack.c.l.b16 %v446
    %v484 = vunpack.c.l.b16 %v447
    %v485 = vunpack.c.l.b16 %v448
    %v486 = vunpack.c.l.b16 %v449
    %v487 = vunpack.c.l.b16 %v450
    %v488 = vunpack.c.l.b16 %v451
    %v489 = vunpack.c.l.b16 %v452
    %v490 = vunpack.c.l.b16 %v453
    %v491 = vunpack.c.l.b16 %v454
    %v492 = vunpack.c.l.b16 %v455
    %v493 = vunpack.c.l.b16 %v456
    %v494 = vunpack.c.l.b16 %v457
    %v495 = vpack.c.b16 %v480, %v479
    %v496 = vpack.c.b16 %v482, %v481
    %v497 = vpack.c.b16 %v484, %v483
    %v498 = vpack.c.b16 %v486, %v485
    %v499 = vpack.c.b16 %v488, %v487
    %v500 = vpack.c.b16 %v490, %v489
    %v501 = vpack.c.b16 %v492, %v491
    %v502 = vpack.c.b16 %v494, %v493
    %511 = vmatpush.bf16.msra.mxu0 %v502
    %512 = vmatpush.bf16.msra.mxu0 %v501
    %513 = vmatpush.bf16.msra.mxu0 %v500
    %514 = vmatpush.bf16.msra.mxu0 %v499
    %515 = vmatpush.bf16.msra.mxu0 %v498
    %516 = vmatpush.bf16.msra.mxu0 %v497
    %517 = vmatpush.bf16.msra.mxu0 %v496
    %518 = vmatpush.bf16.msra.mxu0 %v495
    %519 = vmatmul.bf16.gmra.mxu0 %v440
    %v520 = vpop.f32.mrf.mxu0
    %v521 = vadd.f32 %v461, %v520
    %v522 = vpop.f32.mrf.mxu0
    %523 = vdwg.mxu0
    %v524 = vmax.f32 %v521, 0.0
    %v525 = vadd.f32 %v524, %v439
    %v526 = vpack.c.bf16 %v525, %v525
    %s527 = scalar_lea.vmem [#allocation7], 256
    %v528 = vld [vmem:[%s527] sm:$0xf]
    %v529 = vld [vmem:[%s527 + $0x4] sm:$0xf]
    %v530 = vld [vmem:[%s527 + $0x8] sm:$0xf]
    %v531 = vld [vmem:[%s527 + $0xc] sm:$0xf]
    %v532 = vld [vmem:[%s527 + $0x10] sm:$0xf]
    %v533 = vld [vmem:[%s527 + $0x14] sm:$0xf]
    %v534 = vld [vmem:[%s527 + $0x18] sm:$0xf]
    %v535 = vld [vmem:[%s527 + $0x1c] sm:$0xf]
    %v536 = vld [vmem:[%s527 + $0x20] sm:$0xf]
    %v537 = vld [vmem:[%s527 + $0x24] sm:$0xf]
    %v538 = vld [vmem:[%s527 + $0x28] sm:$0xf]
    %v539 = vld [vmem:[%s527 + $0x2c] sm:$0xf]
    %v540 = vld [vmem:[%s527 + $0x30] sm:$0xf]
    %v541 = vld [vmem:[%s527 + $0x34] sm:$0xf]
    %v542 = vld [vmem:[%s527 + $0x38] sm:$0xf]
    %v543 = vld [vmem:[%s527 + $0x3c] sm:$0xf]
    %s544 = scalar_lea.vmem [#allocation8], 4
    %v545 = vld [vmem:[%s544] sm:$0x1]
    %v547 = vperm.slane %v545, 0
    %v565 = vunpack.c.l.b16 %v528
    %v566 = vunpack.c.l.b16 %v529
    %v567 = vunpack.c.l.b16 %v530
    %v568 = vunpack.c.l.b16 %v531
    %v569 = vunpack.c.l.b16 %v532
    %v570 = vunpack.c.l.b16 %v533
    %v571 = vunpack.c.l.b16 %v534
    %v572 = vunpack.c.l.b16 %v535
    %v573 = vunpack.c.l.b16 %v536
    %v574 = vunpack.c.l.b16 %v537
    %v575 = vunpack.c.l.b16 %v538
    %v576 = vunpack.c.l.b16 %v539
    %v577 = vunpack.c.l.b16 %v540
    %v578 = vunpack.c.l.b16 %v541
    %v579 = vunpack.c.l.b16 %v542
    %v580 = vunpack.c.l.b16 %v543
    %v581 = vpack.c.b16 %v566, %v565
    %v582 = vpack.c.b16 %v568, %v567
    %v583 = vpack.c.b16 %v570, %v569
    %v584 = vpack.c.b16 %v572, %v571
    %v585 = vpack.c.b16 %v574, %v573
    %v586 = vpack.c.b16 %v576, %v575
    %v587 = vpack.c.b16 %v578, %v577
    %v588 = vpack.c.b16 %v580, %v579
    %597 = vmatpush.bf16.msra.mxu0 %v588
    %598 = vmatpush.bf16.msra.mxu0 %v587
    %599 = vmatpush.bf16.msra.mxu0 %v586
    %600 = vmatpush.bf16.msra.mxu0 %v585
    %601 = vmatpush.bf16.msra.mxu0 %v584
    %602 = vmatpush.bf16.msra.mxu0 %v583
    %603 = vmatpush.bf16.msra.mxu0 %v582
    %604 = vmatpush.bf16.msra.mxu0 %v581
    %605 = vmatmul.bf16.gmra.mxu0 %v526
    %v606 = vpop.f32.mrf.mxu0
    %v607 = vadd.f32 %v547, %v606
    %v608 = vpop.f32.mrf.mxu0
    %609 = vdwg.mxu0
    %v610 = vmax.f32 %v607, 0.0
    %v611 = vpack.c.bf16 %v610, %v610
    %s612 = scalar_lea.vmem [#allocation7], 320
    %v613 = vld [vmem:[%s612] sm:$0xf]
    %v614 = vld [vmem:[%s612 + $0x4] sm:$0xf]
    %v615 = vld [vmem:[%s612 + $0x8] sm:$0xf]
    %v616 = vld [vmem:[%s612 + $0xc] sm:$0xf]
    %v617 = vld [vmem:[%s612 + $0x10] sm:$0xf]
    %v618 = vld [vmem:[%s612 + $0x14] sm:$0xf]
    %v619 = vld [vmem:[%s612 + $0x18] sm:$0xf]
    %v620 = vld [vmem:[%s612 + $0x1c] sm:$0xf]
    %v621 = vld [vmem:[%s612 + $0x20] sm:$0xf]
    %v622 = vld [vmem:[%s612 + $0x24] sm:$0xf]
    %v623 = vld [vmem:[%s612 + $0x28] sm:$0xf]
    %v624 = vld [vmem:[%s612 + $0x2c] sm:$0xf]
    %v625 = vld [vmem:[%s612 + $0x30] sm:$0xf]
    %v626 = vld [vmem:[%s612 + $0x34] sm:$0xf]
    %v627 = vld [vmem:[%s612 + $0x38] sm:$0xf]
    %v628 = vld [vmem:[%s612 + $0x3c] sm:$0xf]
    %s629 = scalar_lea.vmem [#allocation8], 5
    %v630 = vld [vmem:[%s629] sm:$0x1]
    %v632 = vperm.slane %v630, 0
    %v650 = vunpack.c.l.b16 %v613
    %v651 = vunpack.c.l.b16 %v614
    %v652 = vunpack.c.l.b16 %v615
    %v653 = vunpack.c.l.b16 %v616
    %v654 = vunpack.c.l.b16 %v617
    %v655 = vunpack.c.l.b16 %v618
    %v656 = vunpack.c.l.b16 %v619
    %v657 = vunpack.c.l.b16 %v620
    %v658 = vunpack.c.l.b16 %v621
    %v659 = vunpack.c.l.b16 %v622
    %v660 = vunpack.c.l.b16 %v623
    %v661 = vunpack.c.l.b16 %v624
    %v662 = vunpack.c.l.b16 %v625
    %v663 = vunpack.c.l.b16 %v626
    %v664 = vunpack.c.l.b16 %v627
    %v665 = vunpack.c.l.b16 %v628
    %v666 = vpack.c.b16 %v651, %v650
    %v667 = vpack.c.b16 %v653, %v652
    %v668 = vpack.c.b16 %v655, %v654
    %v669 = vpack.c.b16 %v657, %v656
    %v670 = vpack.c.b16 %v659, %v658
    %v671 = vpack.c.b16 %v661, %v660
    %v672 = vpack.c.b16 %v663, %v662
    %v673 = vpack.c.b16 %v665, %v664
    %682 = vmatpush.bf16.msra.mxu0 %v673
    %683 = vmatpush.bf16.msra.mxu0 %v672
    %684 = vmatpush.bf16.msra.mxu0 %v671
    %685 = vmatpush.bf16.msra.mxu0 %v670
    %686 = vmatpush.bf16.msra.mxu0 %v669
    %687 = vmatpush.bf16.msra.mxu0 %v668
    %688 = vmatpush.bf16.msra.mxu0 %v667
    %689 = vmatpush.bf16.msra.mxu0 %v666
    %690 = vmatmul.bf16.gmra.mxu0 %v611
    %v691 = vpop.f32.mrf.mxu0
    %v692 = vadd.f32 %v632, %v691
    %v693 = vpop.f32.mrf.mxu0
    %694 = vdwg.mxu0
    %v695 = vmax.f32 %v692, 0.0
    %v696 = vadd.f32 %v695, %v610
    %v697 = vpack.c.bf16 %v696, %v696
    %s698 = scalar_lea.vmem [#allocation7], 384
    %v699 = vld [vmem:[%s698] sm:$0xf]
    %v700 = vld [vmem:[%s698 + $0x4] sm:$0xf]
    %v701 = vld [vmem:[%s698 + $0x8] sm:$0xf]
    %v702 = vld [vmem:[%s698 + $0xc] sm:$0xf]
    %v703 = vld [vmem:[%s698 + $0x10] sm:$0xf]
    %v704 = vld [vmem:[%s698 + $0x14] sm:$0xf]
    %v705 = vld [vmem:[%s698 + $0x18] sm:$0xf]
    %v706 = vld [vmem:[%s698 + $0x1c] sm:$0xf]
    %v707 = vld [vmem:[%s698 + $0x20] sm:$0xf]
    %v708 = vld [vmem:[%s698 + $0x24] sm:$0xf]
    %v709 = vld [vmem:[%s698 + $0x28] sm:$0xf]
    %v710 = vld [vmem:[%s698 + $0x2c] sm:$0xf]
    %v711 = vld [vmem:[%s698 + $0x30] sm:$0xf]
    %v712 = vld [vmem:[%s698 + $0x34] sm:$0xf]
    %v713 = vld [vmem:[%s698 + $0x38] sm:$0xf]
    %v714 = vld [vmem:[%s698 + $0x3c] sm:$0xf]
    %s715 = scalar_lea.vmem [#allocation8], 6
    %v716 = vld [vmem:[%s715] sm:$0x1]
    %v718 = vperm.slane %v716, 0
    %v736 = vunpack.c.l.b16 %v699
    %v737 = vunpack.c.l.b16 %v700
    %v738 = vunpack.c.l.b16 %v701
    %v739 = vunpack.c.l.b16 %v702
    %v740 = vunpack.c.l.b16 %v703
    %v741 = vunpack.c.l.b16 %v704
    %v742 = vunpack.c.l.b16 %v705
    %v743 = vunpack.c.l.b16 %v706
    %v744 = vunpack.c.l.b16 %v707
    %v745 = vunpack.c.l.b16 %v708
    %v746 = vunpack.c.l.b16 %v709
    %v747 = vunpack.c.l.b16 %v710
    %v748 = vunpack.c.l.b16 %v711
    %v749 = vunpack.c.l.b16 %v712
    %v750 = vunpack.c.l.b16 %v713
    %v751 = vunpack.c.l.b16 %v714
    %v752 = vpack.c.b16 %v737, %v736
    %v753 = vpack.c.b16 %v739, %v738
    %v754 = vpack.c.b16 %v741, %v740
    %v755 = vpack.c.b16 %v743, %v742
    %v756 = vpack.c.b16 %v745, %v744
    %v757 = vpack.c.b16 %v747, %v746
    %v758 = vpack.c.b16 %v749, %v748
    %v759 = vpack.c.b16 %v751, %v750
    %768 = vmatpush.bf16.msra.mxu0 %v759
    %769 = vmatpush.bf16.msra.mxu0 %v758
    %770 = vmatpush.bf16.msra.mxu0 %v757
    %771 = vmatpush.bf16.msra.mxu0 %v756
    %772 = vmatpush.bf16.msra.mxu0 %v755
    %773 = vmatpush.bf16.msra.mxu0 %v754
    %774 = vmatpush.bf16.msra.mxu0 %v753
    %775 = vmatpush.bf16.msra.mxu0 %v752
    %776 = vmatmul.bf16.gmra.mxu0 %v697
    %v777 = vpop.f32.mrf.mxu0
    %v778 = vadd.f32 %v718, %v777
    %v779 = vpop.f32.mrf.mxu0
    %780 = vdwg.mxu0
    %v781 = vmax.f32 %v778, 0.0
    %v782 = vpack.c.bf16 %v781, %v781
    %s783 = scalar_lea.vmem [#allocation7], 448
    %v784 = vld [vmem:[%s783] sm:$0xf]
    %v785 = vld [vmem:[%s783 + $0x4] sm:$0xf]
    %v786 = vld [vmem:[%s783 + $0x8] sm:$0xf]
    %v787 = vld [vmem:[%s783 + $0xc] sm:$0xf]
    %v788 = vld [vmem:[%s783 + $0x10] sm:$0xf]
    %v789 = vld [vmem:[%s783 + $0x14] sm:$0xf]
    %v790 = vld [vmem:[%s783 + $0x18] sm:$0xf]
    %v791 = vld [vmem:[%s783 + $0x1c] sm:$0xf]
    %v792 = vld [vmem:[%s783 + $0x20] sm:$0xf]
    %v793 = vld [vmem:[%s783 + $0x24] sm:$0xf]
    %v794 = vld [vmem:[%s783 + $0x28] sm:$0xf]
    %v795 = vld [vmem:[%s783 + $0x2c] sm:$0xf]
    %v796 = vld [vmem:[%s783 + $0x30] sm:$0xf]
    %v797 = vld [vmem:[%s783 + $0x34] sm:$0xf]
    %v798 = vld [vmem:[%s783 + $0x38] sm:$0xf]
    %v799 = vld [vmem:[%s783 + $0x3c] sm:$0xf]
    %s800 = scalar_lea.vmem [#allocation8], 7
    %v801 = vld [vmem:[%s800] sm:$0x1]
    %v803 = vperm.slane %v801, 0
    %v821 = vunpack.c.l.b16 %v784
    %v822 = vunpack.c.l.b16 %v785
    %v823 = vunpack.c.l.b16 %v786
    %v824 = vunpack.c.l.b16 %v787
    %v825 = vunpack.c.l.b16 %v788
    %v826 = vunpack.c.l.b16 %v789
    %v827 = vunpack.c.l.b16 %v790
    %v828 = vunpack.c.l.b16 %v791
    %v829 = vunpack.c.l.b16 %v792
    %v830 = vunpack.c.l.b16 %v793
    %v831 = vunpack.c.l.b16 %v794
    %v832 = vunpack.c.l.b16 %v795
    %v833 = vunpack.c.l.b16 %v796
    %v834 = vunpack.c.l.b16 %v797
    %v835 = vunpack.c.l.b16 %v798
    %v836 = vunpack.c.l.b16 %v799
    %v837 = vpack.c.b16 %v822, %v821
    %v838 = vpack.c.b16 %v824, %v823
    %v839 = vpack.c.b16 %v826, %v825
    %v840 = vpack.c.b16 %v828, %v827
    %v841 = vpack.c.b16 %v830, %v829
    %v842 = vpack.c.b16 %v832, %v831
    %v843 = vpack.c.b16 %v834, %v833
    %v844 = vpack.c.b16 %v836, %v835
    %853 = vmatpush.bf16.msra.mxu0 %v844
    %854 = vmatpush.bf16.msra.mxu0 %v843
    %855 = vmatpush.bf16.msra.mxu0 %v842
    %856 = vmatpush.bf16.msra.mxu0 %v841
    %857 = vmatpush.bf16.msra.mxu0 %v840
    %858 = vmatpush.bf16.msra.mxu0 %v839
    %859 = vmatpush.bf16.msra.mxu0 %v838
    %860 = vmatpush.bf16.msra.mxu0 %v837
    %861 = vmatmul.bf16.gmra.mxu0 %v782
    %v862 = vpop.f32.mrf.mxu0
    %v863 = vadd.f32 %v803, %v862
    %v864 = vpop.f32.mrf.mxu0
    %865 = vdwg.mxu0
    %v866 = vmax.f32 %v863, 0.0
    %v867 = vpack.c.bf16 %v866, %v866
    %v868 = vld [vmem:[#allocation10] sm:$0xf]
    %v869 = vld [vmem:[#allocation10 + $0x4] sm:$0xf]
    %v870 = vld [vmem:[#allocation10 + $0x8] sm:$0xf]
    %v871 = vld [vmem:[#allocation10 + $0xc] sm:$0xf]
    %v872 = vld [vmem:[#allocation10 + $0x10] sm:$0xf]
    %v873 = vld [vmem:[#allocation10 + $0x14] sm:$0xf]
    %v874 = vld [vmem:[#allocation10 + $0x18] sm:$0xf]
    %v875 = vld [vmem:[#allocation10 + $0x1c] sm:$0xf]
    %v876 = vld [vmem:[#allocation10 + $0x20] sm:$0xf]
    %v877 = vld [vmem:[#allocation10 + $0x24] sm:$0xf]
    %v878 = vld [vmem:[#allocation10 + $0x28] sm:$0xf]
    %v879 = vld [vmem:[#allocation10 + $0x2c] sm:$0xf]
    %v880 = vld [vmem:[#allocation10 + $0x30] sm:$0xf]
    %v881 = vld [vmem:[#allocation10 + $0x34] sm:$0xf]
    %v882 = vld [vmem:[#allocation10 + $0x38] sm:$0xf]
    %v883 = vld [vmem:[#allocation10 + $0x3c] sm:$0xf]
    %v884 = vld [vmem:[%s6] sm:$0x1]
    %v886 = vperm.slane %v884, 0
    %v904 = vunpack.c.l.b16 %v868
    %v905 = vunpack.c.l.b16 %v869
    %v906 = vunpack.c.l.b16 %v870
    %v907 = vunpack.c.l.b16 %v871
    %v908 = vunpack.c.l.b16 %v872
    %v909 = vunpack.c.l.b16 %v873
    %v910 = vunpack.c.l.b16 %v874
    %v911 = vunpack.c.l.b16 %v875
    %v912 = vunpack.c.l.b16 %v876
    %v913 = vunpack.c.l.b16 %v877
    %v914 = vunpack.c.l.b16 %v878
    %v915 = vunpack.c.l.b16 %v879
    %v916 = vunpack.c.l.b16 %v880
    %v917 = vunpack.c.l.b16 %v881
    %v918 = vunpack.c.l.b16 %v882
    %v919 = vunpack.c.l.b16 %v883
    %v920 = vpack.c.b16 %v905, %v904
    %v921 = vpack.c.b16 %v907, %v906
    %v922 = vpack.c.b16 %v909, %v908
    %v923 = vpack.c.b16 %v911, %v910
    %v924 = vpack.c.b16 %v913, %v912
    %v925 = vpack.c.b16 %v915, %v914
    %v926 = vpack.c.b16 %v917, %v916
    %v927 = vpack.c.b16 %v919, %v918
    %936 = vmatpush.bf16.msra.mxu0 %v927
    %937 = vmatpush.bf16.msra.mxu0 %v926
    %938 = vmatpush.bf16.msra.mxu0 %v925
    %939 = vmatpush.bf16.msra.mxu0 %v924
    %940 = vmatpush.bf16.msra.mxu0 %v923
    %941 = vmatpush.bf16.msra.mxu0 %v922
    %942 = vmatpush.bf16.msra.mxu0 %v921
    %943 = vmatpush.bf16.msra.mxu0 %v920
    %944 = vmatmul.bf16.gmra.mxu0 %v867
    %v945 = vpop.f32.mrf.mxu0
    %v946 = vadd.f32 %v886, %v945
    %v947 = vpop.f32.mrf.mxu0
    %948 = vdwg.mxu0
    %949 = vst [vmem:[#allocation11] sm:$0xff] %v946
    // Predicated region
    $region50: #{tpu_custom_call.1} parent=1 // pred_check
      _
    $region51: #{tpu_custom_call.1} parent=1 // pred_check_branch
      %951 = sbr.rel (0) target = $region53
    $region52: #{tpu_custom_call.1} parent=1 // pred_region
      %953 = vsyncadd [#allocation4], 0
      %s955 = sshll.u32 [#allocation11], 4
      %s956 = int_to_ptr.vmem [resolvable:$true] %s955
      %s957 = sshll.u32 %s7, 4
      %s958 = int_to_ptr.hbm [resolvable:$true] %s957
      %960 = dma.vmem_to_hbm [thread:$0]  %s956, 128, %s958, [#allocation4]
    $region53: #{tpu_custom_call.1} parent=1 // pred_fallthru
      _
    // Predicated region
    $region54: #{tpu_custom_call.1} parent=1 // pred_check
      _
    $region55: #{tpu_custom_call.1} parent=1 // pred_check_branch
      %962 = sbr.rel (0) target = $region57
    $region56: #{tpu_custom_call.1} parent=1 // pred_region
      %964 = dma.done [#allocation4], 128
    $region57: #{tpu_custom_call.1} parent=1 // pred_fallthru
      _
    %965 = vsyncpa [#allocation3], 1
    %966 = vsyncpa [#allocation6], 1
    %967 = vsyncpa [#allocation9], 1
    %968 = vsyncpa [#allocation4], 1

</llo_original>
